<compile_context>
chip_gen: v7x
topology: tpu7x:2x2x1
jax: 0.10.0
libtpu: 0.0.40
codegen_flags: <defaults>
</compile_context>

<pallas_src>
import functools

import jax
import jax.numpy as jnp
from jax import lax
from jax.experimental import pallas as pl
from jax.experimental.pallas import tpu as pltpu


# ------------------------------- kernel -------------------------------------


def _attention2_head_kernel(x_ref, wqkv_ref, wproj_ref, bias_ref, o_ref, *, scale):
    """One grid step = one (batch element, head).

    x_ref:     (C, G)      f32   input activations (same block for every head)
    wqkv_ref:  (3, G, fph) bf16  this head's q/k/v projection columns
    wproj_ref: (fph, G)    bf16  this head's rows of the output projection
    bias_ref:  (1, G)      f32   output-projection bias
    o_ref:     (C, G)      f32   output block, revisited/accumulated across heads
    """
    h = pl.program_id(1)

    @pl.when(h == 0)
    def _init():
        # Start from the projection bias; head contributions accumulate on top.
        o_ref[...] = jnp.broadcast_to(bias_ref[...], o_ref.shape)

    # MXU wants bf16 operands (f32 matmul is emulated with multiple passes);
    # accumulate in f32 via preferred_element_type.
    x = x_ref[...].astype(jnp.bfloat16)
    wq, wk, wv = wqkv_ref[0], wqkv_ref[1], wqkv_ref[2]                # (G, fph)

    q = jnp.dot(x, wq, preferred_element_type=jnp.float32) * scale    # (C, fph)
    k = jnp.dot(x, wk, preferred_element_type=jnp.float32)
    v = jnp.dot(x, wv, preferred_element_type=jnp.float32)

    # scores = (scale * q) @ k^T as a last-dim contraction (no k transpose).
    s = lax.dot_general(q.astype(jnp.bfloat16), k.astype(jnp.bfloat16),
                        (((1,), (1,)), ((), ())),
                        preferred_element_type=jnp.float32)            # (C, C)

    # softmax in f32; exp and the reciprocal go to the EUP (free under MXU).
    s = s - jnp.max(s, axis=-1, keepdims=True)
    p = jnp.exp(s)
    p = p * pl.reciprocal(jnp.sum(p, axis=-1, keepdims=True))          # exact

    ctx = jnp.dot(p.astype(jnp.bfloat16), v.astype(jnp.bfloat16),
                  preferred_element_type=jnp.float32)                  # (C, fph)

    # This head's slice of the output projection:
    #   out += ctx_h @ W_proj[h*fph:(h+1)*fph, :]
    o_ref[...] += jnp.dot(ctx.astype(jnp.bfloat16), wproj_ref[...],
                          preferred_element_type=jnp.float32)


# ------------------------------- wrapper ------------------------------------


def attention2_forward(x, w_qkv, w_proj, b_proj, num_heads):
    """Forward pass of Attention2 on a batch of independent (C, G) problems.

    x:      (B, C, G) float32   (B == 1 matches the PyTorch module)
    w_qkv:  (G, 3G)  pre-transposed (in, out); qkv_bias=False -> no bias
    w_proj: (G, G)   pre-transposed (in, out)
    b_proj: (G,)
    """
    B, C, G = x.shape
    assert G % num_heads == 0, "dim should be divisible by num_heads"
    fph = G // num_heads
    scale = fph ** -0.5

    # Per-head weight layouts (bf16 for the MXU), built once on the host.
    # qkv output column j of (G, 3G) maps to (n, h, f) with j = n*G + h*fph + f,
    # identical to PyTorch's reshape(C, 3, H, fph).
    wqkv_heads = (w_qkv.reshape(G, 3, num_heads, fph)
                  .transpose(2, 1, 0, 3)                       # (H, 3, G, fph)
                  .astype(jnp.bfloat16))
    wproj_heads = (w_proj.reshape(num_heads, fph, G)            # (H, fph, G)
                   .astype(jnp.bfloat16))
    bias = b_proj.reshape(1, G).astype(jnp.float32)

    kernel = functools.partial(_attention2_head_kernel, scale=scale)

    # VMEM budget: double-buffered blocks + in-kernel intermediates + headroom,
    # capped at v7x's 64 MiB physical VMEM.
    f32b, bf16b = 4, 2
    vmem_bytes = (2 * (C * G * f32b + 3 * G * fph * bf16b + fph * G * bf16b + G * f32b)
                  + 2 * C * G * f32b                      # output block
                  + 2 * C * C * f32b                      # scores / probs
                  + 4 * C * fph * f32b + C * G * f32b     # q, k, v, ctx, head-out
                  + (2 << 20))
    vmem_bytes = int(min(max(vmem_bytes, 8 << 20), 64 << 20))

    flops = B * num_heads * (6 * C * G * fph + 4 * C * C * fph + 2 * C * fph * G)
    cost = pl.CostEstimate(
        flops=flops,
        transcendentals=B * num_heads * C * C,
        bytes_accessed=(B * C * G * f32b
                        + B * (wqkv_heads.size + wproj_heads.size) * bf16b
                        + B * G * f32b
                        + B * C * G * f32b))

    # TODO(synk): for C large enough that the (C, C) f32 score tile no longer
    # fits VMEM (v7x: 64 MiB), add a query-row grid axis + flash-style online
    # softmax over KV tiles.
    # TODO(synk): for G < 128, pack several batch elements along the lane dim
    # so the output store is unmasked / lane-dense.
    return pl.pallas_call(
        kernel,
        out_shape=jax.ShapeDtypeStruct((B, C, G), jnp.float32),
        grid_spec=pltpu.PrefetchScalarGridSpec(
            num_scalar_prefetch=0,
            grid=(B, num_heads),
            in_specs=[
                pl.BlockSpec((None, C, G), lambda b, h: (b, 0, 0)),           # x
                pl.BlockSpec((None, 3, G, fph), lambda b, h: (h, 0, 0, 0)),   # qkv W
                pl.BlockSpec((None, fph, G), lambda b, h: (h, 0, 0)),         # proj W
                pl.BlockSpec((1, G), lambda b, h: (0, 0)),                    # proj b
            ],
            out_specs=pl.BlockSpec((None, C, G), lambda b, h: (b, 0, 0)),
        ),
        compiler_params=pltpu.CompilerParams(
            dimension_semantics=("parallel", "arbitrary"),
            vmem_limit_bytes=vmem_bytes),
        cost_estimate=cost,
    )(x, wqkv_heads, wproj_heads, bias)


# --------------------------- pure-JAX references ----------------------------


def attention2_reference(x, w_qkv, w_proj, b_proj, num_heads):
    """Full-precision reference matching the PyTorch module (batched)."""
    B, C, G = x.shape
    H, fph = num_heads, G // num_heads
    scale = fph ** -0.5
    qkv = (x @ w_qkv).reshape(B, C, 3, H, fph).transpose(2, 0, 3, 1, 4)
    q, k, v = qkv[0], qkv[1], qkv[2]                       # (B, H, C, fph)
    attn = jnp.einsum("bhcf,bhkf->bhck", q, k) * scale
    attn = jax.nn.softmax(attn, axis=-1)
    o = jnp.einsum("bhck,bhkf->bhcf", attn, v)
    o = o.transpose(0, 2, 1, 3).reshape(B, C, G)
    return o @ w_proj + b_proj


def attention2_reference_bf16(x, w_qkv, w_proj, b_proj, num_heads):
    """Reference mirroring the kernel's bf16 MXU inputs + f32 accumulation."""
    bf = jnp.bfloat16
    B, C, G = x.shape
    H, fph = num_heads, G // num_heads
    scale = fph ** -0.5
    xb = x.astype(bf)
    wqkv = w_qkv.reshape(G, 3, H, fph).transpose(1, 2, 0, 3).astype(bf)  # (3,H,G,f)
    wp = w_proj.reshape(H, fph, G).astype(bf)
    out = jnp.broadcast_to(b_proj[None, None, :], (B, C, G)).astype(jnp.float32)
    for h in range(H):
        q = jnp.einsum("bcg,gf->bcf", xb, wqkv[0, h],
                       preferred_element_type=jnp.float32) * scale
        k = jnp.einsum("bcg,gf->bcf", xb, wqkv[1, h],
                       preferred_element_type=jnp.float32)
        v = jnp.einsum("bcg,gf->bcf", xb, wqkv[2, h],
                       preferred_element_type=jnp.float32)
        s = jnp.einsum("bcf,bkf->bck", q.astype(bf), k.astype(bf),
                       preferred_element_type=jnp.float32)
        p = jax.nn.softmax(s, axis=-1)
        ctx = jnp.einsum("bck,bkf->bcf", p.astype(bf), v.astype(bf),
                         preferred_element_type=jnp.float32)
        out = out + jnp.einsum("bcf,fg->bcg", ctx.astype(bf), wp[h],
                               preferred_element_type=jnp.float32)
    return out


# --------------------------------- main --------------------------------------


if __name__ == "__main__":
    # Small, lane-dense shapes consistent with the module: B independent
    # problems of C tokens with dim G and H heads (head_dim = 32).
    B, C, G, H = 4, 128, 128, 4

    key = jax.random.PRNGKey(0)
    kx, kqkv, kproj, kb = jax.random.split(key, 4)

    x = jax.random.normal(kx, (B, C, G), dtype=jnp.float32)
    w_qkv = jax.random.normal(kqkv, (G, 3 * G), dtype=jnp.float32) / jnp.sqrt(G)
    w_proj = jax.random.normal(kproj, (G, G), dtype=jnp.float32) / jnp.sqrt(G)
    b_proj = jax.random.normal(kb, (G,), dtype=jnp.float32) * 0.01

    out = attention2_forward(x, w_qkv, w_proj, b_proj, num_heads=H)
    out = jax.block_until_ready(out)
    assert out.shape == (B, C, G)

    # Tight check vs a reference with the same bf16-input / f32-accumulate
    # matmul precision, loose check vs the full-f32 reference.
    ref_bf16 = attention2_reference_bf16(x, w_qkv, w_proj, b_proj, num_heads=H)
    ref_f32 = attention2_reference(x, w_qkv, w_proj, b_proj, num_heads=H)
    assert jnp.allclose(out, ref_bf16, atol=2e-3, rtol=2e-3), (
        "mismatch vs bf16-matmul reference, max abs err = "
        f"{float(jnp.max(jnp.abs(out - ref_bf16)))}")
    assert jnp.allclose(out, ref_f32, atol=5e-2, rtol=5e-2), (
        "mismatch vs f32 reference, max abs err = "
        f"{float(jnp.max(jnp.abs(out - ref_f32)))}")

    print("KERNEL_OK")
</pallas_src>

<mosaic_0001>
module attributes {stable_mosaic.version = 11 : i64} {
  func.func @_attention2_head_kernel(%arg0: i32, %arg1: i32, %arg2: memref<1x128x128xf32, #tpu.memory_space<vmem>>, %arg3: memref<1x3x128x32xbf16, #tpu.memory_space<vmem>>, %arg4: memref<1x32x128xbf16, #tpu.memory_space<vmem>>, %arg5: memref<1x128xf32, #tpu.memory_space<vmem>>, %arg6: memref<1x128x128xf32, #tpu.memory_space<vmem>>) attributes {dimension_semantics = [#tpu.dimension_semantics<parallel>, #tpu.dimension_semantics<arbitrary>], iteration_bounds = array<i64: 4, 4>, scalar_prefetch = 0 : i64, scratch_operands = 0 : i64, tpu.core_type = #tpu.core_type<tc>, window_params = [{transform_indices = @transform_0, window_bounds = array<i64: 1, 128, 128>}, {transform_indices = @transform_1, window_bounds = array<i64: 1, 3, 128, 32>}, {transform_indices = @transform_2, window_bounds = array<i64: 1, 32, 128>}, {pipeline_mode = #tpu.pipeline_mode<synchronous>, transform_indices = @transform_3, window_bounds = array<i64: 1, 128>}, {transform_indices = @transform_4, window_bounds = array<i64: 1, 128, 128>}]} {
    %c0_i32 = arith.constant 0 : i32
    %0 = arith.cmpi eq, %arg1, %c0_i32 : i32
    %1 = arith.extui %0 : i1 to i32
    %c0_i32_0 = arith.constant 0 : i32
    %2 = arith.cmpi ne, %1, %c0_i32_0 : i32
    scf.if %2 {
      %c0_30 = arith.constant 0 : index
      %c0_31 = arith.constant 0 : index
      %43 = vector.load %arg5[%c0_30, %c0_31] : memref<1x128xf32, #tpu.memory_space<vmem>>, vector<1x128xf32>
      %44 = vector.shape_cast %43 : vector<1x128xf32> to vector<1x128xf32>
      %45 = vector.broadcast %44 : vector<1x128xf32> to vector<128x128xf32>
      %c0_32 = arith.constant 0 : index
      %c0_33 = arith.constant 0 : index
      %c0_34 = arith.constant 0 : index
      %46 = vector.load %arg6[%c0_32, %c0_33, %c0_34] : memref<1x128x128xf32, #tpu.memory_space<vmem>>, vector<1x128x128xf32>
      %47 = vector.shape_cast %46 : vector<1x128x128xf32> to vector<128x128xf32>
      %48 = vector.shape_cast %45 : vector<128x128xf32> to vector<1x128x128xf32>
      tpu.vector_store %arg6[%c0_32, %c0_33, %c0_34], %48 {strides = array<i32>} : memref<1x128x128xf32, #tpu.memory_space<vmem>>, vector<1x128x128xf32>,
    } else {
    }
    %c0 = arith.constant 0 : index
    %c0_1 = arith.constant 0 : index
    %c0_2 = arith.constant 0 : index
    %3 = vector.load %arg2[%c0, %c0_1, %c0_2] : memref<1x128x128xf32, #tpu.memory_space<vmem>>, vector<1x128x128xf32>
    %4 = vector.shape_cast %3 : vector<1x128x128xf32> to vector<128x128xf32>
    %5 = arith.truncf %4 : vector<128x128xf32> to vector<128x128xbf16>
    %c0_3 = arith.constant 0 : index
    %c0_4 = arith.constant 0 : index
    %c0_5 = arith.constant 0 : index
    %c0_6 = arith.constant 0 : index
    %6 = vector.load %arg3[%c0_3, %c0_4, %c0_5, %c0_6] : memref<1x3x128x32xbf16, #tpu.memory_space<vmem>>, vector<1x1x128x32xbf16>
    %7 = vector.shape_cast %6 : vector<1x1x128x32xbf16> to vector<128x32xbf16>
    %c0_7 = arith.constant 0 : index
    %c1 = arith.constant 1 : index
    %c0_8 = arith.constant 0 : index
    %c0_9 = arith.constant 0 : index
    %8 = vector.load %arg3[%c0_7, %c1, %c0_8, %c0_9] : memref<1x3x128x32xbf16, #tpu.memory_space<vmem>>, vector<1x1x128x32xbf16>
    %9 = vector.shape_cast %8 : vector<1x1x128x32xbf16> to vector<128x32xbf16>
    %c0_10 = arith.constant 0 : index
    %c2 = arith.constant 2 : index
    %c0_11 = arith.constant 0 : index
    %c0_12 = arith.constant 0 : index
    %10 = vector.load %arg3[%c0_10, %c2, %c0_11, %c0_12] : memref<1x3x128x32xbf16, #tpu.memory_space<vmem>>, vector<1x1x128x32xbf16>
    %11 = vector.shape_cast %10 : vector<1x1x128x32xbf16> to vector<128x32xbf16>
    %cst = arith.constant dense<0.000000e+00> : vector<128x32xf32>
    %12 = tpu.matmul %5, %7, %cst {dimension_numbers = #tpu.dot_dimension_numbers<[1], [0], [0], [1], [0, 0, 1, 1], [], []>} : vector<128x128xbf16>, vector<128x32xbf16>, vector<128x32xf32> -> vector<128x32xf32>
    %cst_13 = arith.constant 0.176776692 : f32
    %13 = vector.broadcast %cst_13 : f32 to vector<128x32xf32>
    %14 = arith.mulf %12, %13 : vector<128x32xf32>
    %cst_14 = arith.constant dense<0.000000e+00> : vector<128x32xf32>
    %15 = tpu.matmul %5, %9, %cst_14 {dimension_numbers = #tpu.dot_dimension_numbers<[1], [0], [0], [1], [0, 0, 1, 1], [], []>} : vector<128x128xbf16>, vector<128x32xbf16>, vector<128x32xf32> -> vector<128x32xf32>
    %cst_15 = arith.constant dense<0.000000e+00> : vector<128x32xf32>
    %16 = tpu.matmul %5, %11, %cst_15 {dimension_numbers = #tpu.dot_dimension_numbers<[1], [0], [0], [1], [0, 0, 1, 1], [], []>} : vector<128x128xbf16>, vector<128x32xbf16>, vector<128x32xf32> -> vector<128x32xf32>
    %17 = arith.truncf %14 : vector<128x32xf32> to vector<128x32xbf16>
    %18 = arith.truncf %15 : vector<128x32xf32> to vector<128x32xbf16>
    %cst_16 = arith.constant dense<0.000000e+00> : vector<128x128xf32>
    %19 = tpu.matmul %17, %18, %cst_16 {dimension_numbers = #tpu.dot_dimension_numbers<[1], [1], [0], [0], [0, 0, 1, 0], [], []>} : vector<128x32xbf16>, vector<128x32xbf16>, vector<128x128xf32> -> vector<128x128xf32>
    %cst_17 = arith.constant dense<0xFF800000> : vector<128xf32>
    %20 = vector.multi_reduction <maximumf>, %19, %cst_17 [1] : vector<128x128xf32> to vector<128xf32>
    %21 = vector.shape_cast %20 : vector<128xf32> to vector<128x1xf32>
    %22 = vector.broadcast %21 : vector<128x1xf32> to vector<128x128xf32>
    %23 = arith.subf %19, %22 : vector<128x128xf32>
    %24 = math.exp %23 : vector<128x128xf32>
    %cst_18 = arith.constant dense<0.000000e+00> : vector<128xf32>
    %25 = vector.multi_reduction <add>, %24, %cst_18 [1] : vector<128x128xf32> to vector<128xf32>
    %26 = vector.shape_cast %25 : vector<128xf32> to vector<128x1xf32>
    %27 = tpu.reciprocal %26 : vector<128x1xf32> -> vector<128x1xf32>
    %28 = vector.broadcast %27 : vector<128x1xf32> to vector<128x128xf32>
    %29 = arith.mulf %24, %28 : vector<128x128xf32>
    %30 = arith.truncf %29 : vector<128x128xf32> to vector<128x128xbf16>
    %31 = arith.truncf %16 : vector<128x32xf32> to vector<128x32xbf16>
    %cst_19 = arith.constant dense<0.000000e+00> : vector<128x32xf32>
    %32 = tpu.matmul %30, %31, %cst_19 {dimension_numbers = #tpu.dot_dimension_numbers<[1], [0], [0], [1], [0, 0, 1, 1], [], []>} : vector<128x128xbf16>, vector<128x32xbf16>, vector<128x32xf32> -> vector<128x32xf32>
    %c0_20 = arith.constant 0 : index
    %c0_21 = arith.constant 0 : index
    %c0_22 = arith.constant 0 : index
    %33 = vector.load %arg6[%c0_20, %c0_21, %c0_22] : memref<1x128x128xf32, #tpu.memory_space<vmem>>, vector<1x128x128xf32>
    %34 = vector.shape_cast %33 : vector<1x128x128xf32> to vector<128x128xf32>
    %35 = arith.truncf %32 : vector<128x32xf32> to vector<128x32xbf16>
    %c0_23 = arith.constant 0 : index
    %c0_24 = arith.constant 0 : index
    %c0_25 = arith.constant 0 : index
    %36 = vector.load %arg4[%c0_23, %c0_24, %c0_25] : memref<1x32x128xbf16, #tpu.memory_space<vmem>>, vector<1x32x128xbf16>
    %37 = vector.shape_cast %36 : vector<1x32x128xbf16> to vector<32x128xbf16>
    %cst_26 = arith.constant dense<0.000000e+00> : vector<128x128xf32>
    %38 = tpu.matmul %35, %37, %cst_26 {dimension_numbers = #tpu.dot_dimension_numbers<[1], [0], [0], [1], [0, 0, 1, 1], [], []>} : vector<128x32xbf16>, vector<32x128xbf16>, vector<128x128xf32> -> vector<128x128xf32>
    %39 = arith.addf %34, %38 : vector<128x128xf32>
    %c0_27 = arith.constant 0 : index
    %c0_28 = arith.constant 0 : index
    %c0_29 = arith.constant 0 : index
    %40 = vector.load %arg6[%c0_27, %c0_28, %c0_29] : memref<1x128x128xf32, #tpu.memory_space<vmem>>, vector<1x128x128xf32>
    %41 = vector.shape_cast %40 : vector<1x128x128xf32> to vector<128x128xf32>
    %42 = vector.shape_cast %39 : vector<128x128xf32> to vector<1x128x128xf32>
    tpu.vector_store %arg6[%c0_27, %c0_28, %c0_29], %42 {strides = array<i32>} : memref<1x128x128xf32, #tpu.memory_space<vmem>>, vector<1x128x128xf32>,
    return
  }
  func.func @transform_0(%arg0: i32, %arg1: i32) -> (i32, i32, i32) {
    %c0_i32 = arith.constant 0 : i32
    %c0_i32_0 = arith.constant 0 : i32
    %c0_i32_1 = arith.constant 0 : i32
    return %arg0, %c0_i32, %c0_i32_0 : i32, i32, i32
  }
  func.func @transform_1(%arg0: i32, %arg1: i32) -> (i32, i32, i32, i32) {
    %c0_i32 = arith.constant 0 : i32
    %c0_i32_0 = arith.constant 0 : i32
    %c0_i32_1 = arith.constant 0 : i32
    %c0_i32_2 = arith.constant 0 : i32
    return %arg1, %c0_i32, %c0_i32_0, %c0_i32_1 : i32, i32, i32, i32
  }
  func.func @transform_2(%arg0: i32, %arg1: i32) -> (i32, i32, i32) {
    %c0_i32 = arith.constant 0 : i32
    %c0_i32_0 = arith.constant 0 : i32
    %c0_i32_1 = arith.constant 0 : i32
    return %arg1, %c0_i32, %c0_i32_0 : i32, i32, i32
  }
  func.func @transform_3(%arg0: i32, %arg1: i32) -> (i32, i32) {
    %c0_i32 = arith.constant 0 : i32
    %c0_i32_0 = arith.constant 0 : i32
    %c0_i32_1 = arith.constant 0 : i32
    return %c0_i32, %c0_i32_0 : i32, i32
  }
  func.func @transform_4(%arg0: i32, %arg1: i32) -> (i32, i32, i32) {
    %c0_i32 = arith.constant 0 : i32
    %c0_i32_0 = arith.constant 0 : i32
    %c0_i32_1 = arith.constant 0 : i32
    return %arg0, %c0_i32, %c0_i32_0 : i32, i32, i32
  }
}

</mosaic_0001>

<llo_original>
// kernel: tpu_custom_call.1
$region0: #{tpu_custom_call.1}
  #allocation0 [shape = 'u32[]', space=smem, size = 0x4, offset = 0x4, fixed_abs, tag = 'smem constant byte address 0x4 - core index']
  #allocation1 [shape = 'u32[144,128]{1,0:T(1,128)}', space=vmem, size = 0x12000, scoped, tag = 'internal scratch']
  %s0 = inlined_call_operand.vmem [shape: f32[4,128,128], index: 0, kind: input, shape index: {}]
  %s1 = inlined_call_operand.vmem [shape: bf16[4,3,128,32], index: 1, kind: input, shape index: {}]
  %s2 = inlined_call_operand.vmem [shape: bf16[4,32,128], index: 2, kind: input, shape index: {}]
  %s3 = inlined_call_operand.vmem [shape: f32[1,128], index: 3, kind: input, shape index: {}]
  %s4 = inlined_call_operand.hbm [shape: f32[4,128,128], index: 4, kind: output, shape index: {}]
  %s5 = sld [smem:[#allocation0]]
  $region53: #{tpu_custom_call.1} parent=0
    _
  %s7 = ssub.s32 1, %s5
  %s8 = scalar_select 0, %s7, %s5
  $region1: #{tpu_custom_call.1} parent=0
    #allocation2 [shape = 'u8[131072]{0}', space=vmem, size = 0x20000, scoped, tag = 'output window, operand 0']
    #allocation3 [shape = 's32[2]{0}', space=sflag, size = 0x8, scoped, tag = 'scoped memory for tpu_custom_call.1']
    %9 = vsyncpa [#allocation3], 0
    %s10 = scalar_lea.sflag [#allocation3], 1
    %11 = vsyncpa %s10, 0
    loop: start=0, step=1, limit=18
    $region2: #{tpu_custom_call.1} parent=1 // loop_pre_header
      _
    $region3: #{tpu_custom_call.1} parent=1 // loop_header
      %s13 = sphi 0, %s17
      %p14 = scmp.ge.s32.totalorder %s13, 18
      %s20 = sphi 0, %s32
      %s21 = sphi 0, %s28
      %s22 = sphi 0, %s20
      %s23 = sphi 0, %s21
      %s24 = sphi 0, %s22
      %s25 = sphi 0, %s23
      %s35 = sphi 0, %s37
      %s38 = sphi 0, %s35
      %s39 = sphi 0, %s38
      %s55 = sphi 0, %s39
      %s61 = sphi 0, %s63
      %s64 = sphi 0, %s61
      %s65 = sphi 0, %s64
      %s81 = sphi 0, %s65
      %s87 = sphi 0, %s89
      %s90 = sphi 0, %s87
      %s91 = sphi 0, %s90
      %s107 = sphi 0, %s91
      %s111 = sphi 0, %s111
      %s113 = sphi 0, %s111
      %s114 = sphi 0, %s113
      %s128 = sphi 0, %s114
      %s134 = sphi 0, %s136
      %s137 = sphi 0, %s134
      %s138 = sphi 0, %s137
      %s154 = sphi 0, %s138
    $region4: #{tpu_custom_call.1} parent=1 // loop_header_branch
      %16 = sbr.rel (%p14) target = $region8
    $region5: #{tpu_custom_call.1} parent=1 // loop_body
      %s18 = ssub.s32 %s13, 1
      %s19 = ssub.s32 %s13, 2
      %s26 = sadd.s32 1, %s21
      %p27 = scmp.ge.s32.totalorder %s26, 4
      %s28 = scalar_select %p27, 0, %s26
      %s29 = sadd.s32 1, %s20
      %s30 = scalar_select %p27, %s29, %s20
      %p31 = scmp.ge.s32.totalorder %s30, 4
      %s32 = scalar_select %p31, 0, %s30
      %s33 = ssub.s32 %s20, %s32
      %p34 = scmp.eq.s32.totalorder %s33, 0
      %s36 = sadd.s32 %s35, 1
      %s37 = scalar_select %p34, %s35, %s36
      %p40 = pneg %p34
      %p41 = scmp.eq.s32.totalorder %s13, 15
      %p42 = por %p40, %p41
      %p43 = scmp.ne.s32.totalorder %s35, %s38
      %p44 = scmp.eq.s32.totalorder %s13, 0
      %p45 = por %p43, %p44
      %p46 = scmp.ne.s32.totalorder %s35, %s38
      %p47 = scmp.eq.s32.totalorder %s18, 15
      %p48 = por %p46, %p47
      %p49 = scmp.ne.s32.totalorder %s38, %s39
      %p50 = scmp.eq.s32.totalorder %s18, 0
      %p51 = por %p49, %p50
      %p52 = scmp.ne.s32.totalorder %s38, %s39
      %p53 = scmp.eq.s32.totalorder %s19, 15
      %p54 = por %p52, %p53
      %p56 = scmp.ne.s32.totalorder %s39, %s55
      %p57 = scmp.eq.s32.totalorder %s19, 0
      %p58 = por %p56, %p57
      %s59 = ssub.s32 %s21, %s28
      %p60 = scmp.eq.s32.totalorder %s59, 0
      %s62 = sadd.s32 %s61, 1
      %s63 = scalar_select %p60, %s61, %s62
      %p66 = pneg %p60
      %p67 = scmp.eq.s32.totalorder %s13, 15
      %p68 = por %p66, %p67
      %p69 = scmp.ne.s32.totalorder %s61, %s64
      %p70 = scmp.eq.s32.totalorder %s13, 0
      %p71 = por %p69, %p70
      %p72 = scmp.ne.s32.totalorder %s61, %s64
      %p73 = scmp.eq.s32.totalorder %s18, 15
      %p74 = por %p72, %p73
      %p75 = scmp.ne.s32.totalorder %s64, %s65
      %p76 = scmp.eq.s32.totalorder %s18, 0
      %p77 = por %p75, %p76
      %p78 = scmp.ne.s32.totalorder %s64, %s65
      %p79 = scmp.eq.s32.totalorder %s19, 15
      %p80 = por %p78, %p79
      %p82 = scmp.ne.s32.totalorder %s65, %s81
      %p83 = scmp.eq.s32.totalorder %s19, 0
      %p84 = por %p82, %p83
      %s85 = ssub.s32 %s21, %s28
      %p86 = scmp.eq.s32.totalorder %s85, 0
      %s88 = sadd.s32 %s87, 1
      %s89 = scalar_select %p86, %s87, %s88
      %p92 = pneg %p86
      %p93 = scmp.eq.s32.totalorder %s13, 15
      %p94 = por %p92, %p93
      %p95 = scmp.ne.s32.totalorder %s87, %s90
      %p96 = scmp.eq.s32.totalorder %s13, 0
      %p97 = por %p95, %p96
      %p98 = scmp.ne.s32.totalorder %s87, %s90
      %p99 = scmp.eq.s32.totalorder %s18, 15
      %p100 = por %p98, %p99
      %p101 = scmp.ne.s32.totalorder %s90, %s91
      %p102 = scmp.eq.s32.totalorder %s18, 0
      %p103 = por %p101, %p102
      %p104 = scmp.ne.s32.totalorder %s90, %s91
      %p105 = scmp.eq.s32.totalorder %s19, 15
      %p106 = por %p104, %p105
      %p108 = scmp.ne.s32.totalorder %s91, %s107
      %p109 = scmp.eq.s32.totalorder %s19, 0
      %p110 = por %p108, %p109
      %s112 = sadd.s32 %s111, 1
      %p115 = scmp.eq.s32.totalorder %s13, 15
      %p116 = scmp.ne.s32.totalorder %s111, %s113
      %p117 = scmp.eq.s32.totalorder %s13, 0
      %p118 = por %p116, %p117
      %p119 = scmp.ne.s32.totalorder %s111, %s113
      %p120 = scmp.eq.s32.totalorder %s18, 15
      %p121 = por %p119, %p120
      %p122 = scmp.ne.s32.totalorder %s113, %s114
      %p123 = scmp.eq.s32.totalorder %s18, 0
      %p124 = por %p122, %p123
      %p125 = scmp.ne.s32.totalorder %s113, %s114
      %p126 = scmp.eq.s32.totalorder %s19, 15
      %p127 = por %p125, %p126
      %p129 = scmp.ne.s32.totalorder %s114, %s128
      %p130 = scmp.eq.s32.totalorder %s19, 0
      %p131 = por %p129, %p130
      %s132 = ssub.s32 %s20, %s32
      %p133 = scmp.eq.s32.totalorder %s132, 0
      %s135 = sadd.s32 %s134, 1
      %s136 = scalar_select %p133, %s134, %s135
      %p139 = pneg %p133
      %p140 = scmp.eq.s32.totalorder %s13, 15
      %p141 = por %p139, %p140
      %p142 = scmp.ne.s32.totalorder %s134, %s137
      %p143 = scmp.eq.s32.totalorder %s13, 0
      %p144 = por %p142, %p143
      %p145 = scmp.ne.s32.totalorder %s134, %s137
      %p146 = scmp.eq.s32.totalorder %s18, 15
      %p147 = por %p145, %p146
      %p148 = scmp.ne.s32.totalorder %s137, %s138
      %p149 = scmp.eq.s32.totalorder %s18, 0
      %p150 = por %p148, %p149
      %p151 = scmp.ne.s32.totalorder %s137, %s138
      %p152 = scmp.eq.s32.totalorder %s19, 15
      %p153 = por %p151, %p152
      %p155 = scmp.ne.s32.totalorder %s138, %s154
      %p156 = scmp.eq.s32.totalorder %s19, 0
      %p157 = por %p155, %p156
      %p158 = scmp.le.s32.totalorder 1, %s13
      %p159 = scmp.lt.s32.totalorder %s13, 17
      %p160 = pnand %p158, %p159
      %p161 = pneg %p160
      // Predicated region
      $region9: #{tpu_custom_call.1} parent=5 // pred_check
        _
      $region10: #{tpu_custom_call.1} parent=5 // pred_check_branch
        %163 = sbr.rel (%p160) target = $region12
      $region11: #{tpu_custom_call.1} parent=5 // pred_region
        %s164 = ssub.s32 %s13, 1
        // Predicated region
        $region13: #{tpu_custom_call.1} parent=11 // pred_check
          %p165 = pneg %p124
        $region14: #{tpu_custom_call.1} parent=11 // pred_check_branch
          %167 = sbr.rel (%p165) target = $region16
        $region15: #{tpu_custom_call.1} parent=11 // pred_region
          _
        $region16: #{tpu_custom_call.1} parent=11 // pred_fallthru
          _
      $region12: #{tpu_custom_call.1} parent=5 // pred_fallthru
        _
      %p168 = scmp.lt.s32.totalorder %s13, 16
      // Predicated region
      $region17: #{tpu_custom_call.1} parent=5 // pred_check
        %p169 = pneg %p168
      $region18: #{tpu_custom_call.1} parent=5 // pred_check_branch
        %171 = sbr.rel (%p169) target = $region20
      $region19: #{tpu_custom_call.1} parent=5 // pred_region
        // Predicated region
        $region21: #{tpu_custom_call.1} parent=19 // pred_check
          %p172 = pneg %p45
        $region22: #{tpu_custom_call.1} parent=19 // pred_check_branch
          %174 = sbr.rel (%p172) target = $region24
        $region23: #{tpu_custom_call.1} parent=19 // pred_region
          %p175 = scmp.lt.s32.totalorder %s20, 3
          %s176 = scalar_select %p175, %s20, 3
          %s177 = smul.addr %s176, 16
          %s178 = smul.addr %s177, 8
          %s179 = scalar_lea.vmem %s0, %s178
        $region24: #{tpu_custom_call.1} parent=19 // pred_fallthru
          _
        // Predicated region
        $region25: #{tpu_custom_call.1} parent=19 // pred_check
          %p180 = pneg %p71
        $region26: #{tpu_custom_call.1} parent=19 // pred_check_branch
          %182 = sbr.rel (%p180) target = $region28
        $region27: #{tpu_custom_call.1} parent=19 // pred_region
          %p183 = scmp.lt.s32.totalorder %s21, 3
          %s184 = scalar_select %p183, %s21, 3
          %s185 = smul.addr %s184, 48
          %s186 = smul.addr %s185, 4
          %s187 = scalar_lea.vmem %s1, %s186
        $region28: #{tpu_custom_call.1} parent=19 // pred_fallthru
          _
        // Predicated region
        $region29: #{tpu_custom_call.1} parent=19 // pred_check
          %p188 = pneg %p97
        $region30: #{tpu_custom_call.1} parent=19 // pred_check_branch
          %190 = sbr.rel (%p188) target = $region32
        $region31: #{tpu_custom_call.1} parent=19 // pred_region
          %p191 = scmp.lt.s32.totalorder %s21, 3
          %s192 = scalar_select %p191, %s21, 3
          %s193 = smul.addr %s192, 4
          %s194 = smul.addr %s193, 4
          %s195 = scalar_lea.vmem %s2, %s194
        $region32: #{tpu_custom_call.1} parent=19 // pred_fallthru
          _
      $region20: #{tpu_custom_call.1} parent=5 // pred_fallthru
        _
      %p196 = scmp.le.s32.totalorder 1, %s13
      %p197 = scmp.lt.s32.totalorder %s13, 17
      %p198 = pnand %p196, %p197
      %p199 = pneg %p198
      // Predicated region
      $region33: #{tpu_custom_call.1} parent=5 // pred_check
        _
      $region34: #{tpu_custom_call.1} parent=5 // pred_check_branch
        %201 = sbr.rel (%p198) target = $region36
      $region35: #{tpu_custom_call.1} parent=5 // pred_region
        %s202 = ssub.s32 %s13, 1
        %p203 = scmp.lt.s32.totalorder %s22, 3
        %s204 = scalar_select %p203, %s22, 3
        %s205 = smul.addr %s204, 16
        %s206 = smul.addr %s205, 8
        %s207 = scalar_lea.vmem %s0, %s206
        %p208 = pneg %p51
        %p209 = pneg %p48
        %p210 = scmp.lt.s32.totalorder %s23, 3
        %s211 = scalar_select %p210, %s23, 3
        %s212 = smul.addr %s211, 48
        %s213 = smul.addr %s212, 4
        %s214 = scalar_lea.vmem %s1, %s213
        %p215 = pneg %p77
        %p216 = pneg %p74
        %p217 = scmp.lt.s32.totalorder %s23, 3
        %s218 = scalar_select %p217, %s23, 3
        %s219 = smul.addr %s218, 4
        %s220 = smul.addr %s219, 4
        %s221 = scalar_lea.vmem %s2, %s220
        %p222 = pneg %p103
        %p223 = pneg %p100
        %p224 = pneg %p124
        %p225 = pneg %p121
        %p226 = pneg %p150
        %p227 = pneg %p147
        %s228 = sand.u32 %s137, 1
        %s229 = scalar_lea.sflag [#allocation3], %s228
        %s230 = sand.u32 %s137, 1
        %s231 = smul.addr %s230, 128
        %s232 = scalar_lea.vmem [#allocation2], %s231
        %p233 = scmp.lt.s32.totalorder %s22, 3
        %s234 = scalar_select %p233, %s22, 3
        %s235 = smul.addr %s234, 16
        %s236 = smul.addr %s235, 8
        %s237 = scalar_lea.vmem %s0, %s236
        %p238 = scmp.lt.s32.totalorder %s23, 3
        %s239 = scalar_select %p238, %s23, 3
        %s240 = smul.addr %s239, 48
        %s241 = smul.addr %s240, 4
        %s242 = scalar_lea.vmem %s1, %s241
        %p243 = scmp.lt.s32.totalorder %s23, 3
        %s244 = scalar_select %p243, %s23, 3
        %s245 = smul.addr %s244, 4
        %s246 = smul.addr %s245, 4
        %s247 = scalar_lea.vmem %s2, %s246
        %p249 = scmp.eq.s32.totalorder %s23, 0
        // Predicated region
        $region37: #{tpu_custom_call.1} parent=35 // pred_check
          %p250 = pneg %p249
        $region38: #{tpu_custom_call.1} parent=35 // pred_check_branch
          %252 = sbr.rel (%p250) target = $region40
        $region39: #{tpu_custom_call.1} parent=35 // pred_region
          %v253 = vld [vmem:[%s3] sm:$0x1]
          %v255 = vlaneseq
          %v256 = vshrl.u32 %v255, 7
          %v257 = vsub.s32 0, %v256
          %v258 = vrot.slane %v253, %v257
          %260 = vst [vmem:[%s232] sm:$0xff] %v258
          %261 = vst [vmem:[%s232 + $0x8] sm:$0xff] %v258
          %262 = vst [vmem:[%s232 + $0x10] sm:$0xff] %v258
          %263 = vst [vmem:[%s232 + $0x18] sm:$0xff] %v258
          %264 = vst [vmem:[%s232 + $0x20] sm:$0xff] %v258
          %265 = vst [vmem:[%s232 + $0x28] sm:$0xff] %v258
          %266 = vst [vmem:[%s232 + $0x30] sm:$0xff] %v258
          %267 = vst [vmem:[%s232 + $0x38] sm:$0xff] %v258
          %268 = vst [vmem:[%s232 + $0x40] sm:$0xff] %v258
          %269 = vst [vmem:[%s232 + $0x48] sm:$0xff] %v258
          %270 = vst [vmem:[%s232 + $0x50] sm:$0xff] %v258
          %271 = vst [vmem:[%s232 + $0x58] sm:$0xff] %v258
          %272 = vst [vmem:[%s232 + $0x60] sm:$0xff] %v258
          %273 = vst [vmem:[%s232 + $0x68] sm:$0xff] %v258
          %274 = vst [vmem:[%s232 + $0x70] sm:$0xff] %v258
          %275 = vst [vmem:[%s232 + $0x78] sm:$0xff] %v258
        $region40: #{tpu_custom_call.1} parent=35 // pred_fallthru
          _
        %v276 = vld [vmem:[%s237] sm:$0xff]
        %v277 = vld [vmem:[%s237 + $0x8] sm:$0xff]
        %v278 = vld [vmem:[%s237 + $0x10] sm:$0xff]
        %v279 = vld [vmem:[%s237 + $0x18] sm:$0xff]
        %v280 = vld [vmem:[%s237 + $0x20] sm:$0xff]
        %v281 = vld [vmem:[%s237 + $0x28] sm:$0xff]
        %v282 = vld [vmem:[%s237 + $0x30] sm:$0xff]
        %v283 = vld [vmem:[%s237 + $0x38] sm:$0xff]
        %v284 = vld [vmem:[%s237 + $0x40] sm:$0xff]
        %v285 = vld [vmem:[%s237 + $0x48] sm:$0xff]
        %v286 = vld [vmem:[%s237 + $0x50] sm:$0xff]
        %v287 = vld [vmem:[%s237 + $0x58] sm:$0xff]
        %v288 = vld [vmem:[%s237 + $0x60] sm:$0xff]
        %v289 = vld [vmem:[%s237 + $0x68] sm:$0xff]
        %v290 = vld [vmem:[%s237 + $0x70] sm:$0xff]
        %v291 = vld [vmem:[%s237 + $0x78] sm:$0xff]
        %v292 = vpack.c.bf16 %v277, %v276
        %v293 = vpack.c.bf16 %v279, %v278
        %v294 = vpack.c.bf16 %v281, %v280
        %v295 = vpack.c.bf16 %v283, %v282
        %v296 = vpack.c.bf16 %v285, %v284
        %v297 = vpack.c.bf16 %v287, %v286
        %v298 = vpack.c.bf16 %v289, %v288
        %v299 = vpack.c.bf16 %v291, %v290
        %v300 = vld [vmem:[%s242] sm:$0xf]
        %v301 = vld [vmem:[%s242 + $0x4] sm:$0xf]
        %v302 = vld [vmem:[%s242 + $0x8] sm:$0xf]
        %v303 = vld [vmem:[%s242 + $0xc] sm:$0xf]
        %v304 = vld [vmem:[%s242 + $0x10] sm:$0xf]
        %v305 = vld [vmem:[%s242 + $0x14] sm:$0xf]
        %v306 = vld [vmem:[%s242 + $0x18] sm:$0xf]
        %v307 = vld [vmem:[%s242 + $0x1c] sm:$0xf]
        %v308 = vld [vmem:[%s242 + $0x20] sm:$0xf]
        %v309 = vld [vmem:[%s242 + $0x24] sm:$0xf]
        %v310 = vld [vmem:[%s242 + $0x28] sm:$0xf]
        %v311 = vld [vmem:[%s242 + $0x2c] sm:$0xf]
        %v312 = vld [vmem:[%s242 + $0x30] sm:$0xf]
        %v313 = vld [vmem:[%s242 + $0x34] sm:$0xf]
        %v314 = vld [vmem:[%s242 + $0x38] sm:$0xf]
        %v315 = vld [vmem:[%s242 + $0x3c] sm:$0xf]
        %s316 = scalar_lea.vmem %s242, 64
        %v317 = vld [vmem:[%s316] sm:$0xf]
        %v318 = vld [vmem:[%s316 + $0x4] sm:$0xf]
        %v319 = vld [vmem:[%s316 + $0x8] sm:$0xf]
        %v320 = vld [vmem:[%s316 + $0xc] sm:$0xf]
        %v321 = vld [vmem:[%s316 + $0x10] sm:$0xf]
        %v322 = vld [vmem:[%s316 + $0x14] sm:$0xf]
        %v323 = vld [vmem:[%s316 + $0x18] sm:$0xf]
        %v324 = vld [vmem:[%s316 + $0x1c] sm:$0xf]
        %v325 = vld [vmem:[%s316 + $0x20] sm:$0xf]
        %v326 = vld [vmem:[%s316 + $0x24] sm:$0xf]
        %v327 = vld [vmem:[%s316 + $0x28] sm:$0xf]
        %v328 = vld [vmem:[%s316 + $0x2c] sm:$0xf]
        %v329 = vld [vmem:[%s316 + $0x30] sm:$0xf]
        %v330 = vld [vmem:[%s316 + $0x34] sm:$0xf]
        %v331 = vld [vmem:[%s316 + $0x38] sm:$0xf]
        %v332 = vld [vmem:[%s316 + $0x3c] sm:$0xf]
        %s333 = scalar_lea.vmem %s242, 128
        %v334 = vld [vmem:[%s333] sm:$0xf]
        %v335 = vld [vmem:[%s333 + $0x4] sm:$0xf]
        %v336 = vld [vmem:[%s333 + $0x8] sm:$0xf]
        %v337 = vld [vmem:[%s333 + $0xc] sm:$0xf]
        %v338 = vld [vmem:[%s333 + $0x10] sm:$0xf]
        %v339 = vld [vmem:[%s333 + $0x14] sm:$0xf]
        %v340 = vld [vmem:[%s333 + $0x18] sm:$0xf]
        %v341 = vld [vmem:[%s333 + $0x1c] sm:$0xf]
        %v342 = vld [vmem:[%s333 + $0x20] sm:$0xf]
        %v343 = vld [vmem:[%s333 + $0x24] sm:$0xf]
        %v344 = vld [vmem:[%s333 + $0x28] sm:$0xf]
        %v345 = vld [vmem:[%s333 + $0x2c] sm:$0xf]
        %v346 = vld [vmem:[%s333 + $0x30] sm:$0xf]
        %v347 = vld [vmem:[%s333 + $0x34] sm:$0xf]
        %v348 = vld [vmem:[%s333 + $0x38] sm:$0xf]
        %v349 = vld [vmem:[%s333 + $0x3c] sm:$0xf]
        %v366 = vunpack.c.l.b16 %v300
        %v367 = vunpack.c.l.b16 %v301
        %v368 = vunpack.c.l.b16 %v302
        %v369 = vunpack.c.l.b16 %v303
        %v370 = vunpack.c.l.b16 %v304
        %v371 = vunpack.c.l.b16 %v305
        %v372 = vunpack.c.l.b16 %v306
        %v373 = vunpack.c.l.b16 %v307
        %v374 = vunpack.c.l.b16 %v308
        %v375 = vunpack.c.l.b16 %v309
        %v376 = vunpack.c.l.b16 %v310
        %v377 = vunpack.c.l.b16 %v311
        %v378 = vunpack.c.l.b16 %v312
        %v379 = vunpack.c.l.b16 %v313
        %v380 = vunpack.c.l.b16 %v314
        %v381 = vunpack.c.l.b16 %v315
        %v382 = vpack.c.b16 %v367, %v366
        %v383 = vpack.c.b16 %v369, %v368
        %v384 = vpack.c.b16 %v371, %v370
        %v385 = vpack.c.b16 %v373, %v372
        %v386 = vpack.c.b16 %v375, %v374
        %v387 = vpack.c.b16 %v377, %v376
        %v388 = vpack.c.b16 %v379, %v378
        %v389 = vpack.c.b16 %v381, %v380
        %398 = vmatprep.subr.bf16.mxu0 0
        %399 = vmatpush1.bf16.msra.mxu0 %v382
        %400 = vmatprep.subr.bf16.mxu0 0
        %401 = vmatpush1.bf16.msra.mxu0 %v383
        %402 = vmatprep.subr.bf16.mxu0 0
        %403 = vmatpush1.bf16.msra.mxu0 %v384
        %404 = vmatprep.subr.bf16.mxu0 0
        %405 = vmatpush1.bf16.msra.mxu0 %v385
        %406 = vmatprep.subr.bf16.mxu0 0
        %407 = vmatpush1.bf16.msra.mxu0 %v386
        %408 = vmatprep.subr.bf16.mxu0 0
        %409 = vmatpush1.bf16.msra.mxu0 %v387
        %410 = vmatprep.subr.bf16.mxu0 0
        %411 = vmatpush1.bf16.msra.mxu0 %v388
        %412 = vmatprep.subr.bf16.mxu0 0
        %413 = vmatpush1.bf16.msra.mxu0 %v389
        %414 = vmatprep.subr.bf16.mxu0 0
        %415 = vmatpush1.bf16.msra.mxu0 0
        %416 = vmatprep.subr.bf16.mxu0 0
        %417 = vmatpush1.bf16.msra.mxu0 0
        %418 = vmatprep.subr.bf16.mxu0 0
        %419 = vmatpush1.bf16.msra.mxu0 0
        %420 = vmatprep.subr.bf16.mxu0 0
        %421 = vmatpush1.bf16.msra.mxu0 0
        %422 = vmatprep.subr.bf16.mxu0 0
        %423 = vmatpush1.bf16.msra.mxu0 0
        %424 = vmatprep.subr.bf16.mxu0 0
        %425 = vmatpush1.bf16.msra.mxu0 0
        %426 = vmatprep.subr.bf16.mxu0 0
        %427 = vmatpush1.bf16.msra.mxu0 0
        %428 = vmatprep.subr.bf16.mxu0 0
        %429 = vmatpush1.bf16.msra.mxu0 0
        %430 = vmatprep.mubr.bf16.mxu0 0
        %431 = vmatmul.mubr.bf16.gmra.mrb[0].mxu0 %v292
        %v432 = vpop.f32.mrb[0].mxu0
        %v433 = vadd.f32 0.0, %v432
        %v434 = vpop.f32.mrb[0].mxu0
        %v435 = vpop.f32.mrb[0].mxu0
        %v436 = vadd.f32 0.0, %v435
        %v437 = vpop.f32.mrb[0].mxu0
        %438 = vmatprep.mubr.bf16.mxu0 0
        %439 = vmatmul.mubr.bf16.gmra.mrb[0].mxu0 %v293
        %v440 = vpop.f32.mrb[0].mxu0
        %v441 = vadd.f32 0.0, %v440
        %v442 = vpop.f32.mrb[0].mxu0
        %v443 = vpop.f32.mrb[0].mxu0
        %v444 = vadd.f32 0.0, %v443
        %v445 = vpop.f32.mrb[0].mxu0
        %446 = vmatprep.mubr.bf16.mxu0 0
        %447 = vmatmul.mubr.bf16.gmra.mrb[0].mxu0 %v294
        %v448 = vpop.f32.mrb[0].mxu0
        %v449 = vadd.f32 0.0, %v448
        %v450 = vpop.f32.mrb[0].mxu0
        %v451 = vpop.f32.mrb[0].mxu0
        %v452 = vadd.f32 0.0, %v451
        %v453 = vpop.f32.mrb[0].mxu0
        %454 = vmatprep.mubr.bf16.mxu0 0
        %455 = vmatmul.mubr.bf16.gmra.mrb[0].mxu0 %v295
        %v456 = vpop.f32.mrb[0].mxu0
        %v457 = vadd.f32 0.0, %v456
        %v458 = vpop.f32.mrb[0].mxu0
        %v459 = vpop.f32.mrb[0].mxu0
        %v460 = vadd.f32 0.0, %v459
        %v461 = vpop.f32.mrb[0].mxu0
        %462 = vmatprep.mubr.bf16.mxu0 0
        %463 = vmatmul.mubr.bf16.gmra.mrb[0].mxu0 %v296
        %v464 = vpop.f32.mrb[0].mxu0
        %v465 = vadd.f32 0.0, %v464
        %v466 = vpop.f32.mrb[0].mxu0
        %v467 = vpop.f32.mrb[0].mxu0
        %v468 = vadd.f32 0.0, %v467
        %v469 = vpop.f32.mrb[0].mxu0
        %470 = vmatprep.mubr.bf16.mxu0 0
        %471 = vmatmul.mubr.bf16.gmra.mrb[0].mxu0 %v297
        %v472 = vpop.f32.mrb[0].mxu0
        %v473 = vadd.f32 0.0, %v472
        %v474 = vpop.f32.mrb[0].mxu0
        %v475 = vpop.f32.mrb[0].mxu0
        %v476 = vadd.f32 0.0, %v475
        %v477 = vpop.f32.mrb[0].mxu0
        %478 = vmatprep.mubr.bf16.mxu0 0
        %479 = vmatmul.mubr.bf16.gmra.mrb[0].mxu0 %v298
        %v480 = vpop.f32.mrb[0].mxu0
        %v481 = vadd.f32 0.0, %v480
        %v482 = vpop.f32.mrb[0].mxu0
        %v483 = vpop.f32.mrb[0].mxu0
        %v484 = vadd.f32 0.0, %v483
        %v485 = vpop.f32.mrb[0].mxu0
        %486 = vmatprep.mubr.bf16.mxu0 0
        %487 = vmatmul.mubr.bf16.gmra.mrb[0].mxu0 %v299
        %v488 = vpop.f32.mrb[0].mxu0
        %v489 = vadd.f32 0.0, %v488
        %v490 = vpop.f32.mrb[0].mxu0
        %v491 = vpop.f32.mrb[0].mxu0
        %v492 = vadd.f32 0.0, %v491
        %v493 = vpop.f32.mrb[0].mxu0
        %494 = vdwg.mxu0
        %v495 = vmul.f32 %v433, 0.17677669
        %v496 = vmul.f32 %v436, 0.17677669
        %v497 = vmul.f32 %v441, 0.17677669
        %v498 = vmul.f32 %v444, 0.17677669
        %v499 = vmul.f32 %v449, 0.17677669
        %v500 = vmul.f32 %v452, 0.17677669
        %v501 = vmul.f32 %v457, 0.17677669
        %v502 = vmul.f32 %v460, 0.17677669
        %v503 = vmul.f32 %v465, 0.17677669
        %v504 = vmul.f32 %v468, 0.17677669
        %v505 = vmul.f32 %v473, 0.17677669
        %v506 = vmul.f32 %v476, 0.17677669
        %v507 = vmul.f32 %v481, 0.17677669
        %v508 = vmul.f32 %v484, 0.17677669
        %v509 = vmul.f32 %v489, 0.17677669
        %v510 = vmul.f32 %v492, 0.17677669
        %v527 = vunpack.c.l.b16 %v317
        %v528 = vunpack.c.l.b16 %v318
        %v529 = vunpack.c.l.b16 %v319
        %v530 = vunpack.c.l.b16 %v320
        %v531 = vunpack.c.l.b16 %v321
        %v532 = vunpack.c.l.b16 %v322
        %v533 = vunpack.c.l.b16 %v323
        %v534 = vunpack.c.l.b16 %v324
        %v535 = vunpack.c.l.b16 %v325
        %v536 = vunpack.c.l.b16 %v326
        %v537 = vunpack.c.l.b16 %v327
        %v538 = vunpack.c.l.b16 %v328
        %v539 = vunpack.c.l.b16 %v329
        %v540 = vunpack.c.l.b16 %v330
        %v541 = vunpack.c.l.b16 %v331
        %v542 = vunpack.c.l.b16 %v332
        %v543 = vpack.c.b16 %v528, %v527
        %v544 = vpack.c.b16 %v530, %v529
        %v545 = vpack.c.b16 %v532, %v531
        %v546 = vpack.c.b16 %v534, %v533
        %v547 = vpack.c.b16 %v536, %v535
        %v548 = vpack.c.b16 %v538, %v537
        %v549 = vpack.c.b16 %v540, %v539
        %v550 = vpack.c.b16 %v542, %v541
        %559 = vmatprep.subr.bf16.mxu0 0
        %560 = vmatpush1.bf16.msra.mxu0 %v543
        %561 = vmatprep.subr.bf16.mxu0 0
        %562 = vmatpush1.bf16.msra.mxu0 %v544
        %563 = vmatprep.subr.bf16.mxu0 0
        %564 = vmatpush1.bf16.msra.mxu0 %v545
        %565 = vmatprep.subr.bf16.mxu0 0
        %566 = vmatpush1.bf16.msra.mxu0 %v546
        %567 = vmatprep.subr.bf16.mxu0 0
        %568 = vmatpush1.bf16.msra.mxu0 %v547
        %569 = vmatprep.subr.bf16.mxu0 0
        %570 = vmatpush1.bf16.msra.mxu0 %v548
        %571 = vmatprep.subr.bf16.mxu0 0
        %572 = vmatpush1.bf16.msra.mxu0 %v549
        %573 = vmatprep.subr.bf16.mxu0 0
        %574 = vmatpush1.bf16.msra.mxu0 %v550
        %575 = vmatprep.subr.bf16.mxu0 0
        %576 = vmatpush1.bf16.msra.mxu0 0
        %577 = vmatprep.subr.bf16.mxu0 0
        %578 = vmatpush1.bf16.msra.mxu0 0
        %579 = vmatprep.subr.bf16.mxu0 0
        %580 = vmatpush1.bf16.msra.mxu0 0
        %581 = vmatprep.subr.bf16.mxu0 0
        %582 = vmatpush1.bf16.msra.mxu0 0
        %583 = vmatprep.subr.bf16.mxu0 0
        %584 = vmatpush1.bf16.msra.mxu0 0
        %585 = vmatprep.subr.bf16.mxu0 0
        %586 = vmatpush1.bf16.msra.mxu0 0
        %587 = vmatprep.subr.bf16.mxu0 0
        %588 = vmatpush1.bf16.msra.mxu0 0
        %589 = vmatprep.subr.bf16.mxu0 0
        %590 = vmatpush1.bf16.msra.mxu0 0
        %591 = vmatprep.mubr.bf16.mxu0 0
        %592 = vmatmul.mubr.bf16.gmra.mrb[0].mxu0 %v292
        %v593 = vpop.f32.mrb[0].mxu0
        %v594 = vadd.f32 0.0, %v593
        %v595 = vpop.f32.mrb[0].mxu0
        %v596 = vpop.f32.mrb[0].mxu0
        %v597 = vadd.f32 0.0, %v596
        %v598 = vpop.f32.mrb[0].mxu0
        %599 = vmatprep.mubr.bf16.mxu0 0
        %600 = vmatmul.mubr.bf16.gmra.mrb[0].mxu0 %v293
        %v601 = vpop.f32.mrb[0].mxu0
        %v602 = vadd.f32 0.0, %v601
        %v603 = vpop.f32.mrb[0].mxu0
        %v604 = vpop.f32.mrb[0].mxu0
        %v605 = vadd.f32 0.0, %v604
        %v606 = vpop.f32.mrb[0].mxu0
        %607 = vmatprep.mubr.bf16.mxu0 0
        %608 = vmatmul.mubr.bf16.gmra.mrb[0].mxu0 %v294
        %v609 = vpop.f32.mrb[0].mxu0
        %v610 = vadd.f32 0.0, %v609
        %v611 = vpop.f32.mrb[0].mxu0
        %v612 = vpop.f32.mrb[0].mxu0
        %v613 = vadd.f32 0.0, %v612
        %v614 = vpop.f32.mrb[0].mxu0
        %615 = vmatprep.mubr.bf16.mxu0 0
        %616 = vmatmul.mubr.bf16.gmra.mrb[0].mxu0 %v295
        %v617 = vpop.f32.mrb[0].mxu0
        %v618 = vadd.f32 0.0, %v617
        %v619 = vpop.f32.mrb[0].mxu0
        %v620 = vpop.f32.mrb[0].mxu0
        %v621 = vadd.f32 0.0, %v620
        %v622 = vpop.f32.mrb[0].mxu0
        %623 = vmatprep.mubr.bf16.mxu0 0
        %624 = vmatmul.mubr.bf16.gmra.mrb[0].mxu0 %v296
        %v625 = vpop.f32.mrb[0].mxu0
        %v626 = vadd.f32 0.0, %v625
        %v627 = vpop.f32.mrb[0].mxu0
        %v628 = vpop.f32.mrb[0].mxu0
        %v629 = vadd.f32 0.0, %v628
        %v630 = vpop.f32.mrb[0].mxu0
        %631 = vmatprep.mubr.bf16.mxu0 0
        %632 = vmatmul.mubr.bf16.gmra.mrb[0].mxu0 %v297
        %v633 = vpop.f32.mrb[0].mxu0
        %v634 = vadd.f32 0.0, %v633
        %v635 = vpop.f32.mrb[0].mxu0
        %v636 = vpop.f32.mrb[0].mxu0
        %v637 = vadd.f32 0.0, %v636
        %v638 = vpop.f32.mrb[0].mxu0
        %639 = vmatprep.mubr.bf16.mxu0 0
        %640 = vmatmul.mubr.bf16.gmra.mrb[0].mxu0 %v298
        %v641 = vpop.f32.mrb[0].mxu0
        %v642 = vadd.f32 0.0, %v641
        %v643 = vpop.f32.mrb[0].mxu0
        %v644 = vpop.f32.mrb[0].mxu0
        %v645 = vadd.f32 0.0, %v644
        %v646 = vpop.f32.mrb[0].mxu0
        %647 = vmatprep.mubr.bf16.mxu0 0
        %648 = vmatmul.mubr.bf16.gmra.mrb[0].mxu0 %v299
        %v649 = vpop.f32.mrb[0].mxu0
        %v650 = vadd.f32 0.0, %v649
        %v651 = vpop.f32.mrb[0].mxu0
        %v652 = vpop.f32.mrb[0].mxu0
        %v653 = vadd.f32 0.0, %v652
        %v654 = vpop.f32.mrb[0].mxu0
        %655 = vdwg.mxu0
        %v672 = vunpack.c.l.b16 %v334
        %v673 = vunpack.c.l.b16 %v335
        %v674 = vunpack.c.l.b16 %v336
        %v675 = vunpack.c.l.b16 %v337
        %v676 = vunpack.c.l.b16 %v338
        %v677 = vunpack.c.l.b16 %v339
        %v678 = vunpack.c.l.b16 %v340
        %v679 = vunpack.c.l.b16 %v341
        %v680 = vunpack.c.l.b16 %v342
        %v681 = vunpack.c.l.b16 %v343
        %v682 = vunpack.c.l.b16 %v344
        %v683 = vunpack.c.l.b16 %v345
        %v684 = vunpack.c.l.b16 %v346
        %v685 = vunpack.c.l.b16 %v347
        %v686 = vunpack.c.l.b16 %v348
        %v687 = vunpack.c.l.b16 %v349
        %v688 = vpack.c.b16 %v673, %v672
        %v689 = vpack.c.b16 %v675, %v674
        %v690 = vpack.c.b16 %v677, %v676
        %v691 = vpack.c.b16 %v679, %v678
        %v692 = vpack.c.b16 %v681, %v680
        %v693 = vpack.c.b16 %v683, %v682
        %v694 = vpack.c.b16 %v685, %v684
        %v695 = vpack.c.b16 %v687, %v686
        %704 = vmatprep.subr.bf16.mxu0 0
        %705 = vmatpush1.bf16.msra.mxu0 %v688
        %706 = vmatprep.subr.bf16.mxu0 0
        %707 = vmatpush1.bf16.msra.mxu0 %v689
        %708 = vmatprep.subr.bf16.mxu0 0
        %709 = vmatpush1.bf16.msra.mxu0 %v690
        %710 = vmatprep.subr.bf16.mxu0 0
        %711 = vmatpush1.bf16.msra.mxu0 %v691
        %712 = vmatprep.subr.bf16.mxu0 0
        %713 = vmatpush1.bf16.msra.mxu0 %v692
        %714 = vmatprep.subr.bf16.mxu0 0
        %715 = vmatpush1.bf16.msra.mxu0 %v693
        %716 = vmatprep.subr.bf16.mxu0 0
        %717 = vmatpush1.bf16.msra.mxu0 %v694
        %718 = vmatprep.subr.bf16.mxu0 0
        %719 = vmatpush1.bf16.msra.mxu0 %v695
        %720 = vmatprep.subr.bf16.mxu0 0
        %721 = vmatpush1.bf16.msra.mxu0 0
        %722 = vmatprep.subr.bf16.mxu0 0
        %723 = vmatpush1.bf16.msra.mxu0 0
        %724 = vmatprep.subr.bf16.mxu0 0
        %725 = vmatpush1.bf16.msra.mxu0 0
        %726 = vmatprep.subr.bf16.mxu0 0
        %727 = vmatpush1.bf16.msra.mxu0 0
        %728 = vmatprep.subr.bf16.mxu0 0
        %729 = vmatpush1.bf16.msra.mxu0 0
        %730 = vmatprep.subr.bf16.mxu0 0
        %731 = vmatpush1.bf16.msra.mxu0 0
        %732 = vmatprep.subr.bf16.mxu0 0
        %733 = vmatpush1.bf16.msra.mxu0 0
        %734 = vmatprep.subr.bf16.mxu0 0
        %735 = vmatpush1.bf16.msra.mxu0 0
        %736 = vmatprep.mubr.bf16.mxu0 0
        %737 = vmatmul.mubr.bf16.gmra.mrb[0].mxu0 %v292
        %v738 = vpop.f32.mrb[0].mxu0
        %v739 = vadd.f32 0.0, %v738
        %v740 = vpop.f32.mrb[0].mxu0
        %v741 = vpop.f32.mrb[0].mxu0
        %v742 = vadd.f32 0.0, %v741
        %v743 = vpop.f32.mrb[0].mxu0
        %744 = vmatprep.mubr.bf16.mxu0 0
        %745 = vmatmul.mubr.bf16.gmra.mrb[0].mxu0 %v293
        %v746 = vpop.f32.mrb[0].mxu0
        %v747 = vadd.f32 0.0, %v746
        %v748 = vpop.f32.mrb[0].mxu0
        %v749 = vpop.f32.mrb[0].mxu0
        %v750 = vadd.f32 0.0, %v749
        %v751 = vpop.f32.mrb[0].mxu0
        %752 = vmatprep.mubr.bf16.mxu0 0
        %753 = vmatmul.mubr.bf16.gmra.mrb[0].mxu0 %v294
        %v754 = vpop.f32.mrb[0].mxu0
        %v755 = vadd.f32 0.0, %v754
        %v756 = vpop.f32.mrb[0].mxu0
        %v757 = vpop.f32.mrb[0].mxu0
        %v758 = vadd.f32 0.0, %v757
        %v759 = vpop.f32.mrb[0].mxu0
        %760 = vmatprep.mubr.bf16.mxu0 0
        %761 = vmatmul.mubr.bf16.gmra.mrb[0].mxu0 %v295
        %v762 = vpop.f32.mrb[0].mxu0
        %v763 = vadd.f32 0.0, %v762
        %v764 = vpop.f32.mrb[0].mxu0
        %v765 = vpop.f32.mrb[0].mxu0
        %v766 = vadd.f32 0.0, %v765
        %v767 = vpop.f32.mrb[0].mxu0
        %768 = vmatprep.mubr.bf16.mxu0 0
        %769 = vmatmul.mubr.bf16.gmra.mrb[0].mxu0 %v296
        %v770 = vpop.f32.mrb[0].mxu0
        %v771 = vadd.f32 0.0, %v770
        %v772 = vpop.f32.mrb[0].mxu0
        %v773 = vpop.f32.mrb[0].mxu0
        %v774 = vadd.f32 0.0, %v773
        %v775 = vpop.f32.mrb[0].mxu0
        %776 = vmatprep.mubr.bf16.mxu0 0
        %777 = vmatmul.mubr.bf16.gmra.mrb[0].mxu0 %v297
        %v778 = vpop.f32.mrb[0].mxu0
        %v779 = vadd.f32 0.0, %v778
        %v780 = vpop.f32.mrb[0].mxu0
        %v781 = vpop.f32.mrb[0].mxu0
        %v782 = vadd.f32 0.0, %v781
        %v783 = vpop.f32.mrb[0].mxu0
        %784 = vmatprep.mubr.bf16.mxu0 0
        %785 = vmatmul.mubr.bf16.gmra.mrb[0].mxu0 %v298
        %v786 = vpop.f32.mrb[0].mxu0
        %v787 = vadd.f32 0.0, %v786
        %v788 = vpop.f32.mrb[0].mxu0
        %v789 = vpop.f32.mrb[0].mxu0
        %v790 = vadd.f32 0.0, %v789
        %v791 = vpop.f32.mrb[0].mxu0
        %792 = vmatprep.mubr.bf16.mxu0 0
        %793 = vmatmul.mubr.bf16.gmra.mrb[0].mxu0 %v299
        %v794 = vpop.f32.mrb[0].mxu0
        %v795 = vadd.f32 0.0, %v794
        %v796 = vpop.f32.mrb[0].mxu0
        %v797 = vpop.f32.mrb[0].mxu0
        %v798 = vadd.f32 0.0, %v797
        %v799 = vpop.f32.mrb[0].mxu0
        %800 = vdwg.mxu0
        %v801 = vpack.c.bf16 %v496, %v495
        %v802 = vpack.c.bf16 %v498, %v497
        %v803 = vpack.c.bf16 %v500, %v499
        %v804 = vpack.c.bf16 %v502, %v501
        %v805 = vpack.c.bf16 %v504, %v503
        %v806 = vpack.c.bf16 %v506, %v505
        %v807 = vpack.c.bf16 %v508, %v507
        %v808 = vpack.c.bf16 %v510, %v509
        %v809 = vpack.c.bf16 %v597, %v594
        %v810 = vpack.c.bf16 %v605, %v602
        %v811 = vpack.c.bf16 %v613, %v610
        %v812 = vpack.c.bf16 %v621, %v618
        %v813 = vpack.c.bf16 %v629, %v626
        %v814 = vpack.c.bf16 %v637, %v634
        %v815 = vpack.c.bf16 %v645, %v642
        %v816 = vpack.c.bf16 %v653, %v650
        %vm817 = vcmask 261120
        %v819 = vsel %vm817, %v801, 0
        %v822 = vsel %vm817, %v802, 0
        %v825 = vsel %vm817, %v803, 0
        %v828 = vsel %vm817, %v804, 0
        %v831 = vsel %vm817, %v805, 0
        %v834 = vsel %vm817, %v806, 0
        %v837 = vsel %vm817, %v807, 0
        %v840 = vsel %vm817, %v808, 0
        %v843 = vsel %vm817, %v809, 0
        %v846 = vsel %vm817, %v810, 0
        %v849 = vsel %vm817, %v811, 0
        %v852 = vsel %vm817, %v812, 0
        %v855 = vsel %vm817, %v813, 0
        %v858 = vsel %vm817, %v814, 0
        %v861 = vsel %vm817, %v815, 0
        %v864 = vsel %vm817, %v816, 0
        %866 = vmatprep.subr.bf16.mxu0 0
        %867 = vmatpush1.bf16.xpose.msra.mxu0 %v843
        %868 = vmatprep.subr.bf16.mxu0 0
        %869 = vmatpush1.bf16.xpose.msra.mxu0 %v846
        %870 = vmatprep.subr.bf16.mxu0 0
        %871 = vmatpush1.bf16.xpose.msra.mxu0 %v849
        %872 = vmatprep.subr.bf16.mxu0 0
        %873 = vmatpush1.bf16.xpose.msra.mxu0 %v852
        %874 = vmatprep.subr.bf16.mxu0 0
        %875 = vmatpush1.bf16.xpose.msra.mxu0 %v855
        %876 = vmatprep.subr.bf16.mxu0 0
        %877 = vmatpush1.bf16.xpose.msra.mxu0 %v858
        %878 = vmatprep.subr.bf16.mxu0 0
        %879 = vmatpush1.bf16.xpose.msra.mxu0 %v861
        %880 = vmatprep.subr.bf16.mxu0 0
        %881 = vmatpush1.bf16.xpose.msra.mxu0 %v864
        %882 = vmatprep.subr.bf16.mxu0 0
        %883 = vmatpush1.bf16.xpose.msra.mxu0 0
        %884 = vmatprep.subr.bf16.mxu0 0
        %885 = vmatpush1.bf16.xpose.msra.mxu0 0
        %886 = vmatprep.subr.bf16.mxu0 0
        %887 = vmatpush1.bf16.xpose.msra.mxu0 0
        %888 = vmatprep.subr.bf16.mxu0 0
        %889 = vmatpush1.bf16.xpose.msra.mxu0 0
        %890 = vmatprep.subr.bf16.mxu0 0
        %891 = vmatpush1.bf16.xpose.msra.mxu0 0
        %892 = vmatprep.subr.bf16.mxu0 0
        %893 = vmatpush1.bf16.xpose.msra.mxu0 0
        %894 = vmatprep.subr.bf16.mxu0 0
        %895 = vmatpush1.bf16.xpose.msra.mxu0 0
        %896 = vmatprep.subr.bf16.mxu0 0
        %897 = vmatpush1.bf16.xpose.msra.mxu0 0
        %898 = vmatprep.mubr.bf16.mxu0 0
        %899 = vmatmul.mubr.bf16.gmra.mrb[0].mxu0 %v819
        %v900 = vpop.f32.mrb[0].mxu0
        %v901 = vadd.f32 0.0, %v900
        %v902 = vpop.f32.mrb[0].mxu0
        %v903 = vpop.f32.mrb[0].mxu0
        %v904 = vadd.f32 0.0, %v903
        %v905 = vpop.f32.mrb[0].mxu0
        %906 = vmatprep.mubr.bf16.mxu0 0
        %907 = vmatmul.mubr.bf16.gmra.mrb[0].mxu0 %v822
        %v908 = vpop.f32.mrb[0].mxu0
        %v909 = vadd.f32 0.0, %v908
        %v910 = vpop.f32.mrb[0].mxu0
        %v911 = vpop.f32.mrb[0].mxu0
        %v912 = vadd.f32 0.0, %v911
        %v913 = vpop.f32.mrb[0].mxu0
        %914 = vmatprep.mubr.bf16.mxu0 0
        %915 = vmatmul.mubr.bf16.gmra.mrb[0].mxu0 %v825
        %v916 = vpop.f32.mrb[0].mxu0
        %v917 = vadd.f32 0.0, %v916
        %v918 = vpop.f32.mrb[0].mxu0
        %v919 = vpop.f32.mrb[0].mxu0
        %v920 = vadd.f32 0.0, %v919
        %v921 = vpop.f32.mrb[0].mxu0
        %922 = vmatprep.mubr.bf16.mxu0 0
        %923 = vmatmul.mubr.bf16.gmra.mrb[0].mxu0 %v828
        %v924 = vpop.f32.mrb[0].mxu0
        %v925 = vadd.f32 0.0, %v924
        %v926 = vpop.f32.mrb[0].mxu0
        %v927 = vpop.f32.mrb[0].mxu0
        %v928 = vadd.f32 0.0, %v927
        %v929 = vpop.f32.mrb[0].mxu0
        %930 = vmatprep.mubr.bf16.mxu0 0
        %931 = vmatmul.mubr.bf16.gmra.mrb[0].mxu0 %v831
        %v932 = vpop.f32.mrb[0].mxu0
        %v933 = vadd.f32 0.0, %v932
        %v934 = vpop.f32.mrb[0].mxu0
        %v935 = vpop.f32.mrb[0].mxu0
        %v936 = vadd.f32 0.0, %v935
        %v937 = vpop.f32.mrb[0].mxu0
        %938 = vmatprep.mubr.bf16.mxu0 0
        %939 = vmatmul.mubr.bf16.gmra.mrb[0].mxu0 %v834
        %v940 = vpop.f32.mrb[0].mxu0
        %v941 = vadd.f32 0.0, %v940
        %v942 = vpop.f32.mrb[0].mxu0
        %v943 = vpop.f32.mrb[0].mxu0
        %v944 = vadd.f32 0.0, %v943
        %v945 = vpop.f32.mrb[0].mxu0
        %946 = vmatprep.mubr.bf16.mxu0 0
        %947 = vmatmul.mubr.bf16.gmra.mrb[0].mxu0 %v837
        %v948 = vpop.f32.mrb[0].mxu0
        %v949 = vadd.f32 0.0, %v948
        %v950 = vpop.f32.mrb[0].mxu0
        %v951 = vpop.f32.mrb[0].mxu0
        %v952 = vadd.f32 0.0, %v951
        %v953 = vpop.f32.mrb[0].mxu0
        %954 = vmatprep.mubr.bf16.mxu0 0
        %955 = vmatmul.mubr.bf16.gmra.mrb[0].mxu0 %v840
        %v956 = vpop.f32.mrb[0].mxu0
        %v957 = vadd.f32 0.0, %v956
        %v958 = vpop.f32.mrb[0].mxu0
        %v959 = vpop.f32.mrb[0].mxu0
        %v960 = vadd.f32 0.0, %v959
        %v961 = vpop.f32.mrb[0].mxu0
        %962 = vdwg.mxu0
        %963 = vmax.xlane.f32.xlu0 %v901
        %v964 = vpop.xlane.xlu0 %963
        %965 = vmax.xlane.f32.xlu0 %v904
        %v966 = vpop.xlane.xlu0 %965
        %967 = vmax.xlane.f32.xlu0 %v909
        %v968 = vpop.xlane.xlu0 %967
        %969 = vmax.xlane.f32.xlu0 %v912
        %v970 = vpop.xlane.xlu0 %969
        %971 = vmax.xlane.f32.xlu0 %v917
        %v972 = vpop.xlane.xlu0 %971
        %973 = vmax.xlane.f32.xlu0 %v920
        %v974 = vpop.xlane.xlu0 %973
        %975 = vmax.xlane.f32.xlu0 %v925
        %v976 = vpop.xlane.xlu0 %975
        %977 = vmax.xlane.f32.xlu0 %v928
        %v978 = vpop.xlane.xlu0 %977
        %979 = vmax.xlane.f32.xlu0 %v933
        %v980 = vpop.xlane.xlu0 %979
        %981 = vmax.xlane.f32.xlu0 %v936
        %v982 = vpop.xlane.xlu0 %981
        %983 = vmax.xlane.f32.xlu0 %v941
        %v984 = vpop.xlane.xlu0 %983
        %985 = vmax.xlane.f32.xlu0 %v944
        %v986 = vpop.xlane.xlu0 %985
        %987 = vmax.xlane.f32.xlu0 %v949
        %v988 = vpop.xlane.xlu0 %987
        %989 = vmax.xlane.f32.xlu0 %v952
        %v990 = vpop.xlane.xlu0 %989
        %991 = vmax.xlane.f32.xlu0 %v957
        %v992 = vpop.xlane.xlu0 %991
        %993 = vmax.xlane.f32.xlu0 %v960
        %v994 = vpop.xlane.xlu0 %993
        %v995 = vsub.f32 %v901, %v964
        %v996 = vsub.f32 %v904, %v966
        %v997 = vsub.f32 %v909, %v968
        %v998 = vsub.f32 %v912, %v970
        %v999 = vsub.f32 %v917, %v972
        %v1000 = vsub.f32 %v920, %v974
        %v1001 = vsub.f32 %v925, %v976
        %v1002 = vsub.f32 %v928, %v978
        %v1003 = vsub.f32 %v933, %v980
        %v1004 = vsub.f32 %v936, %v982
        %v1005 = vsub.f32 %v941, %v984
        %v1006 = vsub.f32 %v944, %v986
        %v1007 = vsub.f32 %v949, %v988
        %v1008 = vsub.f32 %v952, %v990
        %v1009 = vsub.f32 %v957, %v992
        %v1010 = vsub.f32 %v960, %v994
        %v1011 = vmul.f32 %v995, 1.442695
        %v1012 = vpow.pop %v1011
        %v1013 = vmul.f32 %v996, 1.442695
        %v1014 = vpow.pop %v1013
        %v1015 = vmul.f32 %v997, 1.442695
        %v1016 = vpow.pop %v1015
        %v1017 = vmul.f32 %v998, 1.442695
        %v1018 = vpow.pop %v1017
        %v1019 = vmul.f32 %v999, 1.442695
        %v1020 = vpow.pop %v1019
        %v1021 = vmul.f32 %v1000, 1.442695
        %v1022 = vpow.pop %v1021
        %v1023 = vmul.f32 %v1001, 1.442695
        %v1024 = vpow.pop %v1023
        %v1025 = vmul.f32 %v1002, 1.442695
        %v1026 = vpow.pop %v1025
        %v1027 = vmul.f32 %v1003, 1.442695
        %v1028 = vpow.pop %v1027
        %v1029 = vmul.f32 %v1004, 1.442695
        %v1030 = vpow.pop %v1029
        %v1031 = vmul.f32 %v1005, 1.442695
        %v1032 = vpow.pop %v1031
        %v1033 = vmul.f32 %v1006, 1.442695
        %v1034 = vpow.pop %v1033
        %v1035 = vmul.f32 %v1007, 1.442695
        %v1036 = vpow.pop %v1035
        %v1037 = vmul.f32 %v1008, 1.442695
        %v1038 = vpow.pop %v1037
        %v1039 = vmul.f32 %v1009, 1.442695
        %v1040 = vpow.pop %v1039
        %v1041 = vmul.f32 %v1010, 1.442695
        %v1042 = vpow.pop %v1041
        %1043 = vadd.xlane.f32.xlu0 %v1012
        %v1044 = vpop.xlane.xlu0 %1043
        %1045 = vadd.xlane.f32.xlu0 %v1014
        %v1046 = vpop.xlane.xlu0 %1045
        %1047 = vadd.xlane.f32.xlu0 %v1016
        %v1048 = vpop.xlane.xlu0 %1047
        %1049 = vadd.xlane.f32.xlu0 %v1018
        %v1050 = vpop.xlane.xlu0 %1049
        %1051 = vadd.xlane.f32.xlu0 %v1020
        %v1052 = vpop.xlane.xlu0 %1051
        %1053 = vadd.xlane.f32.xlu0 %v1022
        %v1054 = vpop.xlane.xlu0 %1053
        %1055 = vadd.xlane.f32.xlu0 %v1024
        %v1056 = vpop.xlane.xlu0 %1055
        %1057 = vadd.xlane.f32.xlu0 %v1026
        %v1058 = vpop.xlane.xlu0 %1057
        %1059 = vadd.xlane.f32.xlu0 %v1028
        %v1060 = vpop.xlane.xlu0 %1059
        %1061 = vadd.xlane.f32.xlu0 %v1030
        %v1062 = vpop.xlane.xlu0 %1061
        %1063 = vadd.xlane.f32.xlu0 %v1032
        %v1064 = vpop.xlane.xlu0 %1063
        %1065 = vadd.xlane.f32.xlu0 %v1034
        %v1066 = vpop.xlane.xlu0 %1065
        %1067 = vadd.xlane.f32.xlu0 %v1036
        %v1068 = vpop.xlane.xlu0 %1067
        %1069 = vadd.xlane.f32.xlu0 %v1038
        %v1070 = vpop.xlane.xlu0 %1069
        %1071 = vadd.xlane.f32.xlu0 %v1040
        %v1072 = vpop.xlane.xlu0 %1071
        %1073 = vadd.xlane.f32.xlu0 %v1042
        %v1074 = vpop.xlane.xlu0 %1073
        %v1075 = vrcp.pop %v1044
        %v1076 = vrcp.pop %v1046
        %v1077 = vrcp.pop %v1048
        %v1078 = vrcp.pop %v1050
        %v1079 = vrcp.pop %v1052
        %v1080 = vrcp.pop %v1054
        %v1081 = vrcp.pop %v1056
        %v1082 = vrcp.pop %v1058
        %v1083 = vrcp.pop %v1060
        %v1084 = vrcp.pop %v1062
        %v1085 = vrcp.pop %v1064
        %v1086 = vrcp.pop %v1066
        %v1087 = vrcp.pop %v1068
        %v1088 = vrcp.pop %v1070
        %v1089 = vrcp.pop %v1072
        %v1090 = vrcp.pop %v1074
        %v1091 = vmul.f32 %v1012, %v1075
        %v1092 = vmul.f32 %v1014, %v1076
        %v1093 = vmul.f32 %v1016, %v1077
        %v1094 = vmul.f32 %v1018, %v1078
        %v1095 = vmul.f32 %v1020, %v1079
        %v1096 = vmul.f32 %v1022, %v1080
        %v1097 = vmul.f32 %v1024, %v1081
        %v1098 = vmul.f32 %v1026, %v1082
        %v1099 = vmul.f32 %v1028, %v1083
        %v1100 = vmul.f32 %v1030, %v1084
        %v1101 = vmul.f32 %v1032, %v1085
        %v1102 = vmul.f32 %v1034, %v1086
        %v1103 = vmul.f32 %v1036, %v1087
        %v1104 = vmul.f32 %v1038, %v1088
        %v1105 = vmul.f32 %v1040, %v1089
        %v1106 = vmul.f32 %v1042, %v1090
        %v1107 = vpack.c.bf16 %v1092, %v1091
        %v1108 = vpack.c.bf16 %v1094, %v1093
        %v1109 = vpack.c.bf16 %v1096, %v1095
        %v1110 = vpack.c.bf16 %v1098, %v1097
        %v1111 = vpack.c.bf16 %v1100, %v1099
        %v1112 = vpack.c.bf16 %v1102, %v1101
        %v1113 = vpack.c.bf16 %v1104, %v1103
        %v1114 = vpack.c.bf16 %v1106, %v1105
        %v1115 = vpack.c.bf16 %v742, %v739
        %v1116 = vpack.c.bf16 %v750, %v747
        %v1117 = vpack.c.bf16 %v758, %v755
        %v1118 = vpack.c.bf16 %v766, %v763
        %v1119 = vpack.c.bf16 %v774, %v771
        %v1120 = vpack.c.bf16 %v782, %v779
        %v1121 = vpack.c.bf16 %v790, %v787
        %v1122 = vpack.c.bf16 %v798, %v795
        %1123 = vmatprep.subr.bf16.mxu0 0
        %1124 = vmatpush1.bf16.msra.mxu0 %v1115
        %1125 = vmatprep.subr.bf16.mxu0 0
        %1126 = vmatpush1.bf16.msra.mxu0 %v1116
        %1127 = vmatprep.subr.bf16.mxu0 0
        %1128 = vmatpush1.bf16.msra.mxu0 %v1117
        %1129 = vmatprep.subr.bf16.mxu0 0
        %1130 = vmatpush1.bf16.msra.mxu0 %v1118
        %1131 = vmatprep.subr.bf16.mxu0 0
        %1132 = vmatpush1.bf16.msra.mxu0 %v1119
        %1133 = vmatprep.subr.bf16.mxu0 0
        %1134 = vmatpush1.bf16.msra.mxu0 %v1120
        %1135 = vmatprep.subr.bf16.mxu0 0
        %1136 = vmatpush1.bf16.msra.mxu0 %v1121
        %1137 = vmatprep.subr.bf16.mxu0 0
        %1138 = vmatpush1.bf16.msra.mxu0 %v1122
        %1139 = vmatprep.subr.bf16.mxu0 0
        %1140 = vmatpush1.bf16.msra.mxu0 0
        %1141 = vmatprep.subr.bf16.mxu0 0
        %1142 = vmatpush1.bf16.msra.mxu0 0
        %1143 = vmatprep.subr.bf16.mxu0 0
        %1144 = vmatpush1.bf16.msra.mxu0 0
        %1145 = vmatprep.subr.bf16.mxu0 0
        %1146 = vmatpush1.bf16.msra.mxu0 0
        %1147 = vmatprep.subr.bf16.mxu0 0
        %1148 = vmatpush1.bf16.msra.mxu0 0
        %1149 = vmatprep.subr.bf16.mxu0 0
        %1150 = vmatpush1.bf16.msra.mxu0 0
        %1151 = vmatprep.subr.bf16.mxu0 0
        %1152 = vmatpush1.bf16.msra.mxu0 0
        %1153 = vmatprep.subr.bf16.mxu0 0
        %1154 = vmatpush1.bf16.msra.mxu0 0
        %1155 = vmatprep.mubr.bf16.mxu0 0
        %1156 = vmatmul.mubr.bf16.gmra.mrb[0].mxu0 %v1107
        %v1157 = vpop.f32.mrb[0].mxu0
        %v1158 = vadd.f32 0.0, %v1157
        %v1159 = vpop.f32.mrb[0].mxu0
        %v1160 = vpop.f32.mrb[0].mxu0
        %v1161 = vadd.f32 0.0, %v1160
        %v1162 = vpop.f32.mrb[0].mxu0
        %1163 = vmatprep.mubr.bf16.mxu0 0
        %1164 = vmatmul.mubr.bf16.gmra.mrb[0].mxu0 %v1108
        %v1165 = vpop.f32.mrb[0].mxu0
        %v1166 = vadd.f32 0.0, %v1165
        %v1167 = vpop.f32.mrb[0].mxu0
        %v1168 = vpop.f32.mrb[0].mxu0
        %v1169 = vadd.f32 0.0, %v1168
        %v1170 = vpop.f32.mrb[0].mxu0
        %1171 = vmatprep.mubr.bf16.mxu0 0
        %1172 = vmatmul.mubr.bf16.gmra.mrb[0].mxu0 %v1109
        %v1173 = vpop.f32.mrb[0].mxu0
        %v1174 = vadd.f32 0.0, %v1173
        %v1175 = vpop.f32.mrb[0].mxu0
        %v1176 = vpop.f32.mrb[0].mxu0
        %v1177 = vadd.f32 0.0, %v1176
        %v1178 = vpop.f32.mrb[0].mxu0
        %1179 = vmatprep.mubr.bf16.mxu0 0
        %1180 = vmatmul.mubr.bf16.gmra.mrb[0].mxu0 %v1110
        %v1181 = vpop.f32.mrb[0].mxu0
        %v1182 = vadd.f32 0.0, %v1181
        %v1183 = vpop.f32.mrb[0].mxu0
        %v1184 = vpop.f32.mrb[0].mxu0
        %v1185 = vadd.f32 0.0, %v1184
        %v1186 = vpop.f32.mrb[0].mxu0
        %1187 = vmatprep.mubr.bf16.mxu0 0
        %1188 = vmatmul.mubr.bf16.gmra.mrb[0].mxu0 %v1111
        %v1189 = vpop.f32.mrb[0].mxu0
        %v1190 = vadd.f32 0.0, %v1189
        %v1191 = vpop.f32.mrb[0].mxu0
        %v1192 = vpop.f32.mrb[0].mxu0
        %v1193 = vadd.f32 0.0, %v1192
        %v1194 = vpop.f32.mrb[0].mxu0
        %1195 = vmatprep.mubr.bf16.mxu0 0
        %1196 = vmatmul.mubr.bf16.gmra.mrb[0].mxu0 %v1112
        %v1197 = vpop.f32.mrb[0].mxu0
        %v1198 = vadd.f32 0.0, %v1197
        %v1199 = vpop.f32.mrb[0].mxu0
        %v1200 = vpop.f32.mrb[0].mxu0
        %v1201 = vadd.f32 0.0, %v1200
        %v1202 = vpop.f32.mrb[0].mxu0
        %1203 = vmatprep.mubr.bf16.mxu0 0
        %1204 = vmatmul.mubr.bf16.gmra.mrb[0].mxu0 %v1113
        %v1205 = vpop.f32.mrb[0].mxu0
        %v1206 = vadd.f32 0.0, %v1205
        %v1207 = vpop.f32.mrb[0].mxu0
        %v1208 = vpop.f32.mrb[0].mxu0
        %v1209 = vadd.f32 0.0, %v1208
        %v1210 = vpop.f32.mrb[0].mxu0
        %1211 = vmatprep.mubr.bf16.mxu0 0
        %1212 = vmatmul.mubr.bf16.gmra.mrb[0].mxu0 %v1114
        %v1213 = vpop.f32.mrb[0].mxu0
        %v1214 = vadd.f32 0.0, %v1213
        %v1215 = vpop.f32.mrb[0].mxu0
        %v1216 = vpop.f32.mrb[0].mxu0
        %v1217 = vadd.f32 0.0, %v1216
        %v1218 = vpop.f32.mrb[0].mxu0
        %1219 = vdwg.mxu0
        %v1220 = vld [vmem:[%s232] sm:$0xff]
        %v1221 = vld [vmem:[%s232 + $0x8] sm:$0xff]
        %v1222 = vld [vmem:[%s232 + $0x10] sm:$0xff]
        %v1223 = vld [vmem:[%s232 + $0x18] sm:$0xff]
        %v1224 = vld [vmem:[%s232 + $0x20] sm:$0xff]
        %v1225 = vld [vmem:[%s232 + $0x28] sm:$0xff]
        %v1226 = vld [vmem:[%s232 + $0x30] sm:$0xff]
        %v1227 = vld [vmem:[%s232 + $0x38] sm:$0xff]
        %v1228 = vld [vmem:[%s232 + $0x40] sm:$0xff]
        %v1229 = vld [vmem:[%s232 + $0x48] sm:$0xff]
        %v1230 = vld [vmem:[%s232 + $0x50] sm:$0xff]
        %v1231 = vld [vmem:[%s232 + $0x58] sm:$0xff]
        %v1232 = vld [vmem:[%s232 + $0x60] sm:$0xff]
        %v1233 = vld [vmem:[%s232 + $0x68] sm:$0xff]
        %v1234 = vld [vmem:[%s232 + $0x70] sm:$0xff]
        %v1235 = vld [vmem:[%s232 + $0x78] sm:$0xff]
        %v1236 = vpack.c.bf16 %v1161, %v1158
        %v1237 = vpack.c.bf16 %v1169, %v1166
        %v1238 = vpack.c.bf16 %v1177, %v1174
        %v1239 = vpack.c.bf16 %v1185, %v1182
        %v1240 = vpack.c.bf16 %v1193, %v1190
        %v1241 = vpack.c.bf16 %v1201, %v1198
        %v1242 = vpack.c.bf16 %v1209, %v1206
        %v1243 = vpack.c.bf16 %v1217, %v1214
        %v1244 = vld [vmem:[%s247] sm:$0xf]
        %v1245 = vld [vmem:[%s247 + $0x4] sm:$0xf]
        %v1246 = vld [vmem:[%s247 + $0x8] sm:$0xf]
        %v1247 = vld [vmem:[%s247 + $0xc] sm:$0xf]
        %v1252 = vunpack.c.l.b16 %v1244
        %v1253 = vunpack.c.l.b16 %v1245
        %v1254 = vunpack.c.l.b16 %v1246
        %v1255 = vunpack.c.l.b16 %v1247
        %v1256 = vpack.c.b16 %v1253, %v1252
        %v1257 = vpack.c.b16 %v1255, %v1254
        %v1261 = vsel %vm817, %v1236, 0
        %v1264 = vsel %vm817, %v1237, 0
        %v1267 = vsel %vm817, %v1238, 0
        %v1270 = vsel %vm817, %v1239, 0
        %v1273 = vsel %vm817, %v1240, 0
        %v1276 = vsel %vm817, %v1241, 0
        %v1279 = vsel %vm817, %v1242, 0
        %v1282 = vsel %vm817, %v1243, 0
        %1284 = vmatprep.subr.bf16.mxu0 0
        %1285 = vmatpush1.bf16.msra.mxu0 %v1256
        %1286 = vmatprep.subr.bf16.mxu0 0
        %1287 = vmatpush1.bf16.msra.mxu0 %v1257
        %1288 = vmatprep.subr.bf16.mxu0 0
        %1289 = vmatpush1.bf16.msra.mxu0 0
        %1290 = vmatprep.subr.bf16.mxu0 0
        %1291 = vmatpush1.bf16.msra.mxu0 0
        %1292 = vmatprep.subr.bf16.mxu0 0
        %1293 = vmatpush1.bf16.msra.mxu0 0
        %1294 = vmatprep.subr.bf16.mxu0 0
        %1295 = vmatpush1.bf16.msra.mxu0 0
        %1296 = vmatprep.subr.bf16.mxu0 0
        %1297 = vmatpush1.bf16.msra.mxu0 0
        %1298 = vmatprep.subr.bf16.mxu0 0
        %1299 = vmatpush1.bf16.msra.mxu0 0
        %1300 = vmatprep.subr.bf16.mxu0 0
        %1301 = vmatpush1.bf16.msra.mxu0 0
        %1302 = vmatprep.subr.bf16.mxu0 0
        %1303 = vmatpush1.bf16.msra.mxu0 0
        %1304 = vmatprep.subr.bf16.mxu0 0
        %1305 = vmatpush1.bf16.msra.mxu0 0
        %1306 = vmatprep.subr.bf16.mxu0 0
        %1307 = vmatpush1.bf16.msra.mxu0 0
        %1308 = vmatprep.subr.bf16.mxu0 0
        %1309 = vmatpush1.bf16.msra.mxu0 0
        %1310 = vmatprep.subr.bf16.mxu0 0
        %1311 = vmatpush1.bf16.msra.mxu0 0
        %1312 = vmatprep.subr.bf16.mxu0 0
        %1313 = vmatpush1.bf16.msra.mxu0 0
        %1314 = vmatprep.subr.bf16.mxu0 0
        %1315 = vmatpush1.bf16.msra.mxu0 0
        %1316 = vmatprep.mubr.bf16.mxu0 0
        %1317 = vmatmul.mubr.bf16.gmra.mrb[0].mxu0 %v1261
        %v1318 = vpop.f32.mrb[0].mxu0
        %v1319 = vadd.f32 0.0, %v1318
        %v1320 = vpop.f32.mrb[0].mxu0
        %v1321 = vpop.f32.mrb[0].mxu0
        %v1322 = vadd.f32 0.0, %v1321
        %v1323 = vpop.f32.mrb[0].mxu0
        %1324 = vmatprep.mubr.bf16.mxu0 0
        %1325 = vmatmul.mubr.bf16.gmra.mrb[0].mxu0 %v1264
        %v1326 = vpop.f32.mrb[0].mxu0
        %v1327 = vadd.f32 0.0, %v1326
        %v1328 = vpop.f32.mrb[0].mxu0
        %v1329 = vpop.f32.mrb[0].mxu0
        %v1330 = vadd.f32 0.0, %v1329
        %v1331 = vpop.f32.mrb[0].mxu0
        %1332 = vmatprep.mubr.bf16.mxu0 0
        %1333 = vmatmul.mubr.bf16.gmra.mrb[0].mxu0 %v1267
        %v1334 = vpop.f32.mrb[0].mxu0
        %v1335 = vadd.f32 0.0, %v1334
        %v1336 = vpop.f32.mrb[0].mxu0
        %v1337 = vpop.f32.mrb[0].mxu0
        %v1338 = vadd.f32 0.0, %v1337
        %v1339 = vpop.f32.mrb[0].mxu0
        %1340 = vmatprep.mubr.bf16.mxu0 0
        %1341 = vmatmul.mubr.bf16.gmra.mrb[0].mxu0 %v1270
        %v1342 = vpop.f32.mrb[0].mxu0
        %v1343 = vadd.f32 0.0, %v1342
        %v1344 = vpop.f32.mrb[0].mxu0
        %v1345 = vpop.f32.mrb[0].mxu0
        %v1346 = vadd.f32 0.0, %v1345
        %v1347 = vpop.f32.mrb[0].mxu0
        %1348 = vmatprep.mubr.bf16.mxu0 0
        %1349 = vmatmul.mubr.bf16.gmra.mrb[0].mxu0 %v1273
        %v1350 = vpop.f32.mrb[0].mxu0
        %v1351 = vadd.f32 0.0, %v1350
        %v1352 = vpop.f32.mrb[0].mxu0
        %v1353 = vpop.f32.mrb[0].mxu0
        %v1354 = vadd.f32 0.0, %v1353
        %v1355 = vpop.f32.mrb[0].mxu0
        %1356 = vmatprep.mubr.bf16.mxu0 0
        %1357 = vmatmul.mubr.bf16.gmra.mrb[0].mxu0 %v1276
        %v1358 = vpop.f32.mrb[0].mxu0
        %v1359 = vadd.f32 0.0, %v1358
        %v1360 = vpop.f32.mrb[0].mxu0
        %v1361 = vpop.f32.mrb[0].mxu0
        %v1362 = vadd.f32 0.0, %v1361
        %v1363 = vpop.f32.mrb[0].mxu0
        %1364 = vmatprep.mubr.bf16.mxu0 0
        %1365 = vmatmul.mubr.bf16.gmra.mrb[0].mxu0 %v1279
        %v1366 = vpop.f32.mrb[0].mxu0
        %v1367 = vadd.f32 0.0, %v1366
        %v1368 = vpop.f32.mrb[0].mxu0
        %v1369 = vpop.f32.mrb[0].mxu0
        %v1370 = vadd.f32 0.0, %v1369
        %v1371 = vpop.f32.mrb[0].mxu0
        %1372 = vmatprep.mubr.bf16.mxu0 0
        %1373 = vmatmul.mubr.bf16.gmra.mrb[0].mxu0 %v1282
        %v1374 = vpop.f32.mrb[0].mxu0
        %v1375 = vadd.f32 0.0, %v1374
        %v1376 = vpop.f32.mrb[0].mxu0
        %v1377 = vpop.f32.mrb[0].mxu0
        %v1378 = vadd.f32 0.0, %v1377
        %v1379 = vpop.f32.mrb[0].mxu0
        %1380 = vdwg.mxu0
        %v1381 = vadd.f32 %v1220, %v1319
        %v1382 = vadd.f32 %v1221, %v1322
        %v1383 = vadd.f32 %v1222, %v1327
        %v1384 = vadd.f32 %v1223, %v1330
        %v1385 = vadd.f32 %v1224, %v1335
        %v1386 = vadd.f32 %v1225, %v1338
        %v1387 = vadd.f32 %v1226, %v1343
        %v1388 = vadd.f32 %v1227, %v1346
        %v1389 = vadd.f32 %v1228, %v1351
        %v1390 = vadd.f32 %v1229, %v1354
        %v1391 = vadd.f32 %v1230, %v1359
        %v1392 = vadd.f32 %v1231, %v1362
        %v1393 = vadd.f32 %v1232, %v1367
        %v1394 = vadd.f32 %v1233, %v1370
        %v1395 = vadd.f32 %v1234, %v1375
        %v1396 = vadd.f32 %v1235, %v1378
        %1397 = vst [vmem:[%s232] sm:$0xff] %v1381
        %1398 = vst [vmem:[%s232 + $0x8] sm:$0xff] %v1382
        %1399 = vst [vmem:[%s232 + $0x10] sm:$0xff] %v1383
        %1400 = vst [vmem:[%s232 + $0x18] sm:$0xff] %v1384
        %1401 = vst [vmem:[%s232 + $0x20] sm:$0xff] %v1385
        %1402 = vst [vmem:[%s232 + $0x28] sm:$0xff] %v1386
        %1403 = vst [vmem:[%s232 + $0x30] sm:$0xff] %v1387
        %1404 = vst [vmem:[%s232 + $0x38] sm:$0xff] %v1388
        %1405 = vst [vmem:[%s232 + $0x40] sm:$0xff] %v1389
        %1406 = vst [vmem:[%s232 + $0x48] sm:$0xff] %v1390
        %1407 = vst [vmem:[%s232 + $0x50] sm:$0xff] %v1391
        %1408 = vst [vmem:[%s232 + $0x58] sm:$0xff] %v1392
        %1409 = vst [vmem:[%s232 + $0x60] sm:$0xff] %v1393
        %1410 = vst [vmem:[%s232 + $0x68] sm:$0xff] %v1394
        %1411 = vst [vmem:[%s232 + $0x70] sm:$0xff] %v1395
        %1412 = vst [vmem:[%s232 + $0x78] sm:$0xff] %v1396
        %s1413 = sand.u32 %s137, 1
        %s1414 = scalar_lea.sflag [#allocation3], %s1413
        %s1415 = sand.u32 %s137, 1
        %s1416 = smul.addr %s1415, 128
        %s1417 = scalar_lea.vmem [#allocation2], %s1416
        // Predicated region
        $region41: #{tpu_custom_call.1} parent=35 // pred_check
          %p1418 = pneg %p147
        $region42: #{tpu_custom_call.1} parent=35 // pred_check_branch
          %1420 = sbr.rel (%p1418) target = $region44
        $region43: #{tpu_custom_call.1} parent=35 // pred_region
          %s1422 = ssub.s32 2048, 2048
          %1423 = vsyncadd %s1414, %s1422
          %s1424 = smul.addr %s22, 16
          %s1425 = smul.addr %s1424, 128
          %s1426 = scalar_lea.hbm %s4, %s1425
          %s1427 = sshll.u32 %s1417, 4
          %s1428 = int_to_ptr.vmem [resolvable:$true] %s1427
          %1433 = dma.vmem_to_hbm [thread:$0]  %s1428, 2048, %s1426, %s1414, 128, 128, 8
        $region44: #{tpu_custom_call.1} parent=35 // pred_fallthru
          _
      $region36: #{tpu_custom_call.1} parent=5 // pred_fallthru
        _
      %p1434 = scmp.le.s32.totalorder 2, %s13
      // Predicated region
      $region45: #{tpu_custom_call.1} parent=5 // pred_check
        %p1435 = pneg %p1434
      $region46: #{tpu_custom_call.1} parent=5 // pred_check_branch
        %1437 = sbr.rel (%p1435) target = $region48
      $region47: #{tpu_custom_call.1} parent=5 // pred_region
        %s1438 = ssub.s32 %s13, 2
        // Predicated region
        $region49: #{tpu_custom_call.1} parent=47 // pred_check
          %p1439 = pneg %p153
        $region50: #{tpu_custom_call.1} parent=47 // pred_check_branch
          %1441 = sbr.rel (%p1439) target = $region52
        $region51: #{tpu_custom_call.1} parent=47 // pred_region
          %s1442 = sand.u32 %s138, 1
          %s1443 = scalar_lea.sflag [#allocation3], %s1442
          %s1444 = sand.u32 %s138, 1
          %s1445 = smul.addr %s1444, 128
          %s1446 = scalar_lea.vmem [#allocation2], %s1445
          %1447 = dma.done %s1443, 2048
        $region52: #{tpu_custom_call.1} parent=47 // pred_fallthru
          _
      $region48: #{tpu_custom_call.1} parent=5 // pred_fallthru
        _
    $region6: #{tpu_custom_call.1} parent=1 // loop_footer
      %s17 = sadd.s32 1, %s13
    $region7: #{tpu_custom_call.1} parent=1 // loop_footer_branch
      %12 = sbr.rel target = $region3
    $region8: #{tpu_custom_call.1} parent=1 // loop_exit
      _
    %1448 = vsyncpa [#allocation3], 1
    %s1449 = scalar_lea.sflag [#allocation3], 1
    %1450 = vsyncpa %s1449, 1

</llo_original>
